<compile_context>
chip_gen: v7x
topology: tpu7x:2x2x1
jax: 0.10.0
libtpu: 0.0.40
codegen_flags: <defaults>
</compile_context>

<pallas_src>
import functools

import jax
import jax.numpy as jnp
import numpy as np
from jax.experimental import pallas as pl
from jax.experimental.pallas import tpu as pltpu

_NUM_LAYERS = 10   # stem, r1.fc1, r1.fc2, r1.sc, r2.fc1, r2.fc2,
                   # r3.fc1, r3.fc2, r3.sc, fc_out
_BMAX = 256        # bias slab width (max layer output width)
_BN_EPS = 1e-5


# ------------------------------- the kernel -------------------------------- #

def keystroke_resnet_kernel(x_ref, w11_ref, w12_ref, w22_ref, w21_ref,
                            b_ref, o_ref):
    """x_ref:   [TB, 128]     bf16  (31 real features, zero-padded)
       w11_ref: [3, 128, 128] bf16  (stem, r3.fc2, fc_out)
       w12_ref: [2, 128, 256] bf16  (r1.fc1, r1.sc)
       w22_ref: [3, 256, 256] bf16  (r1.fc2, r2.fc1, r2.fc2)
       w21_ref: [2, 256, 128] bf16  (r3.fc1, r3.sc)
       b_ref:   [10, 256]     f32   (BN folded in; padded cols are zero)
       o_ref:   [TB, 128]     f32   (num_classes real columns, rest zero)
    BN is pre-folded into (w, b); dropout = identity (eval mode)."""

    def lin(h16, w, bias_row, n):
        # MXU matmul (bf16 operands, f32 accumulation) + f32 bias row.
        return (jnp.dot(h16, w, preferred_element_type=jnp.float32)
                + b_ref[pl.ds(bias_row, 1), :n])

    # stem: fc1 (31->128) + bn1, relu
    h = jnp.maximum(lin(x_ref[...], w11_ref[0], 0, 128), 0.0)

    # res1: 128 -> 256, linear shortcut
    h16 = h.astype(jnp.bfloat16)
    out = jnp.maximum(lin(h16, w12_ref[0], 1, 256), 0.0)           # fc1+bn1
    out = lin(out.astype(jnp.bfloat16), w22_ref[0], 2, 256)        # fc2+bn2
    sc = lin(h16, w12_ref[1], 3, 256)                              # shortcut
    h = jnp.maximum(out + sc, 0.0)

    # res2: 256 -> 256, identity shortcut
    h16 = h.astype(jnp.bfloat16)
    out = jnp.maximum(lin(h16, w22_ref[1], 4, 256), 0.0)
    out = lin(out.astype(jnp.bfloat16), w22_ref[2], 5, 256)
    h = jnp.maximum(out + h, 0.0)

    # res3: 256 -> 128, linear shortcut
    h16 = h.astype(jnp.bfloat16)
    out = jnp.maximum(lin(h16, w21_ref[0], 6, 128), 0.0)
    out = lin(out.astype(jnp.bfloat16), w11_ref[1], 7, 128)
    sc = lin(h16, w21_ref[1], 8, 128)
    h = jnp.maximum(out + sc, 0.0)

    # classifier fc_out: 128 -> num_classes (padded to 128, lane-dense store)
    o_ref[...] = lin(h.astype(jnp.bfloat16), w11_ref[2], 9, 128)


# -------------------------- param folding / packing ------------------------- #

def _round_up(n, m):
    return (n + m - 1) // m * m


def _fold_bn(w, b, scale=None, shift=None):
    """Fold eval-mode BN affine (scale, shift) into Linear (w [in,out], b)."""
    b = b.reshape(-1)
    if scale is not None:
        scale = scale.reshape(-1)
        shift = shift.reshape(-1)
        w = w * scale[None, :]
        b = b * scale + shift
    return w, b


def _pad_w(w, kin, kout):
    fin, fout = w.shape
    return jnp.zeros((kin, kout), jnp.float32).at[:fin, :fout].set(w)


def _pad_b(b):
    b = b.reshape(-1)
    return jnp.zeros((_BMAX,), jnp.float32).at[:b.shape[0]].set(b)


def pack_params(params):
    """Fold BN into the preceding Linear and pack weights tightly by shape
    into four bf16 slabs + one f32 bias slab.  Call ONCE and reuse."""
    p = list(params)
    fused = [_fold_bn(p[0], p[1], p[2], p[3])]                          # stem
    i = 4
    for has_shortcut in (True, False, True):                            # res1/2/3
        fused.append(_fold_bn(p[i], p[i + 1], p[i + 2], p[i + 3]))      # fc1+bn1
        fused.append(_fold_bn(p[i + 4], p[i + 5], p[i + 6], p[i + 7]))  # fc2+bn2
        if has_shortcut:
            fused.append(_fold_bn(p[i + 8], p[i + 9]))                  # shortcut
            i += 10
        else:
            i += 8
    fused.append(_fold_bn(p[i], p[i + 1]))                              # fc_out
    assert len(fused) == _NUM_LAYERS

    # layer index -> slab: 0 stem, 1 r1.fc1, 2 r1.fc2, 3 r1.sc, 4 r2.fc1,
    #                      5 r2.fc2, 6 r3.fc1, 7 r3.fc2, 8 r3.sc, 9 fc_out
    w11 = jnp.stack([_pad_w(fused[0][0], 128, 128),
                     _pad_w(fused[7][0], 128, 128),
                     _pad_w(fused[9][0], 128, 128)]).astype(jnp.bfloat16)
    w12 = jnp.stack([_pad_w(fused[1][0], 128, 256),
                     _pad_w(fused[3][0], 128, 256)]).astype(jnp.bfloat16)
    w22 = jnp.stack([_pad_w(fused[2][0], 256, 256),
                     _pad_w(fused[4][0], 256, 256),
                     _pad_w(fused[5][0], 256, 256)]).astype(jnp.bfloat16)
    w21 = jnp.stack([_pad_w(fused[6][0], 256, 128),
                     _pad_w(fused[8][0], 256, 128)]).astype(jnp.bfloat16)
    b_slab = jnp.stack([_pad_b(b) for _, b in fused])                   # [10,256] f32
    return w11, w12, w22, w21, b_slab


# ------------------------------ JAX wrapper -------------------------------- #

def keystroke_resnet(x, packed, num_classes, tile_b=2048):
    """x: [B, input_size] f32; packed = pack_params(params) (precomputed)."""
    batch, fin = x.shape
    w11, w12, w22, w21, b_slab = packed

    # Batch tiling: multiple of 16 (bf16 row packing); split into >=2
    # "parallel" steps when possible so v7x's second TensorCore is used.
    tb = min(tile_b, _round_up(batch, 16))
    if tb > 16 and _round_up(batch, tb) // tb < 2:
        tb = _round_up((batch + 1) // 2, 16)
    b_pad = _round_up(batch, tb)

    x_pad = jnp.zeros((b_pad, 128), jnp.bfloat16).at[:batch, :fin].set(
        x.astype(jnp.bfloat16))

    grid = (b_pad // tb,)
    weight_bytes = (w11.size + w12.size + w22.size + w21.size) * 2
    flops = 2 * b_pad * (w11.size + w12.size + w22.size + w21.size) // 1  # MACs*2
    bytes_accessed = (weight_bytes + b_slab.size * 4
                      + x_pad.size * 2 + b_pad * 128 * 4)

    out = pl.pallas_call(
        keystroke_resnet_kernel,
        out_shape=jax.ShapeDtypeStruct((b_pad, 128), jnp.float32),
        grid=grid,
        in_specs=[
            # activations: tiled over batch, double-buffered by the pipeline
            pl.BlockSpec((tb, 128), lambda i: (i, 0)),
            # packed weights / biases: constant index map -> VMEM-resident
            pl.BlockSpec((3, 128, 128), lambda i: (0, 0, 0)),
            pl.BlockSpec((2, 128, 256), lambda i: (0, 0, 0)),
            pl.BlockSpec((3, 256, 256), lambda i: (0, 0, 0)),
            pl.BlockSpec((2, 256, 128), lambda i: (0, 0, 0)),
            pl.BlockSpec((_NUM_LAYERS, _BMAX), lambda i: (0, 0)),
        ],
        out_specs=pl.BlockSpec((tb, 128), lambda i: (i, 0)),
        compiler_params=pltpu.CompilerParams(
            dimension_semantics=("parallel",)),
        cost_estimate=pl.CostEstimate(flops=flops, transcendentals=0,
                                      bytes_accessed=bytes_accessed),
    )(x_pad, w11, w12, w22, w21, b_slab)
    return out[:batch, :num_classes]


# --------------------------- deterministic params --------------------------- #

def _init_linear(key, fin, fout):
    kw, kb = jax.random.split(key)
    bound = 1.0 / np.sqrt(fin)
    w = jax.random.uniform(kw, (fin, fout), jnp.float32, -bound, bound)
    b = jax.random.uniform(kb, (1, fout), jnp.float32, -bound, bound)
    return w, b


def _init_bn(key, f):
    kg, kb, km, kv = jax.random.split(key, 4)
    gamma = 1.0 + 0.1 * jax.random.normal(kg, (1, f), jnp.float32)
    beta = 0.1 * jax.random.normal(kb, (1, f), jnp.float32)
    mean = 0.1 * jax.random.normal(km, (1, f), jnp.float32)
    var = jnp.abs(1.0 + 0.1 * jax.random.normal(kv, (1, f), jnp.float32))
    scale = gamma * jax.lax.rsqrt(var + _BN_EPS)
    shift = beta - mean * scale
    return scale, shift


def _init_resblock(key, fin, fout):
    keys = jax.random.split(key, 5)
    w1, b1 = _init_linear(keys[0], fin, fout)
    s1, t1 = _init_bn(keys[1], fout)
    w2, b2 = _init_linear(keys[2], fout, fout)
    s2, t2 = _init_bn(keys[3], fout)
    p = [w1, b1, s1, t1, w2, b2, s2, t2]
    if fin != fout:
        ws, bs = _init_linear(keys[4], fin, fout)
        p += [ws, bs]
    return p


def build_params(key, input_size, num_classes):
    keys = jax.random.split(key, 6)
    params = []
    w, b = _init_linear(keys[0], input_size, 128)
    s, t = _init_bn(keys[1], 128)
    params += [w, b, s, t]
    params += _init_resblock(keys[2], 128, 256)   # res1 (linear shortcut)
    params += _init_resblock(keys[3], 256, 256)   # res2 (identity shortcut)
    params += _init_resblock(keys[4], 256, 128)   # res3 (linear shortcut)
    wo, bo = _init_linear(keys[5], 128, num_classes)
    params += [wo, bo]
    return params


# --------------------------- pure-JAX reference ----------------------------- #

def reference_forward(x, params):
    def lin(h, w, b):
        return h @ w + b

    def bn(h, s, t):
        return h * s + t

    def block(h, p, has_shortcut):
        w1, b1, s1, t1, w2, b2, s2, t2 = p[:8]
        out = jax.nn.relu(bn(lin(h, w1, b1), s1, t1))
        out = bn(lin(out, w2, b2), s2, t2)
        sc = lin(h, p[8], p[9]) if has_shortcut else h
        return jax.nn.relu(out + sc)

    p = list(params)
    h = jax.nn.relu(bn(lin(x, p[0], p[1]), p[2], p[3]))
    i = 4
    h = block(h, p[i:i + 10], True); i += 10
    h = block(h, p[i:i + 8], False); i += 8
    h = block(h, p[i:i + 10], True); i += 10
    return lin(h, p[i], p[i + 1])


# ----------------------------------- main ----------------------------------- #

if __name__ == "__main__":
    key = jax.random.PRNGKey(0)
    k_x, k_p = jax.random.split(key)

    batch = 8
    input_size = 31      # number of keystroke features (columns 1: of the CSV)
    num_classes = 5

    x = jax.random.normal(k_x, (batch, input_size), jnp.float32)
    params = build_params(k_p, input_size, num_classes)

    # BN folding + packing is done ONCE, outside the per-call path.
    packed = pack_params(params)
    packed = jax.block_until_ready(packed)

    fwd = jax.jit(functools.partial(keystroke_resnet, num_classes=num_classes))
    out = fwd(x, packed)
    out = jax.block_until_ready(out)

    ref = reference_forward(x, params)
    # bf16 matmul operands (f32 accumulation) -> loose-ish tolerance vs f32 ref.
    np.testing.assert_allclose(np.asarray(out), np.asarray(ref),
                               rtol=5e-2, atol=5e-2)

    print("KERNEL_OK")
</pallas_src>

<mosaic_0001>
module attributes {stable_mosaic.version = 11 : i64} {
  func.func @keystroke_resnet_kernel(%arg0: i32, %arg1: memref<16x128xbf16, #tpu.memory_space<vmem>>, %arg2: memref<3x128x128xbf16, #tpu.memory_space<vmem>>, %arg3: memref<2x128x256xbf16, #tpu.memory_space<vmem>>, %arg4: memref<3x256x256xbf16, #tpu.memory_space<vmem>>, %arg5: memref<2x256x128xbf16, #tpu.memory_space<vmem>>, %arg6: memref<10x256xf32, #tpu.memory_space<vmem>>, %arg7: memref<16x128xf32, #tpu.memory_space<vmem>>) attributes {dimension_semantics = [#tpu.dimension_semantics<parallel>], iteration_bounds = array<i64: 1>, scalar_prefetch = 0 : i64, scratch_operands = 0 : i64, tpu.core_type = #tpu.core_type<tc>, window_params = [{transform_indices = @transform_0, window_bounds = array<i64: 16, 128>}, {pipeline_mode = #tpu.pipeline_mode<synchronous>, transform_indices = @transform_1, window_bounds = array<i64: 3, 128, 128>}, {pipeline_mode = #tpu.pipeline_mode<synchronous>, transform_indices = @transform_2, window_bounds = array<i64: 2, 128, 256>}, {pipeline_mode = #tpu.pipeline_mode<synchronous>, transform_indices = @transform_3, window_bounds = array<i64: 3, 256, 256>}, {pipeline_mode = #tpu.pipeline_mode<synchronous>, transform_indices = @transform_4, window_bounds = array<i64: 2, 256, 128>}, {pipeline_mode = #tpu.pipeline_mode<synchronous>, transform_indices = @transform_5, window_bounds = array<i64: 10, 256>}, {transform_indices = @transform_6, window_bounds = array<i64: 16, 128>}]} {
    %c0 = arith.constant 0 : index
    %c0_0 = arith.constant 0 : index
    %0 = vector.load %arg1[%c0, %c0_0] : memref<16x128xbf16, #tpu.memory_space<vmem>>, vector<16x128xbf16>
    %c0_1 = arith.constant 0 : index
    %c0_2 = arith.constant 0 : index
    %c0_3 = arith.constant 0 : index
    %1 = vector.load %arg2[%c0_1, %c0_2, %c0_3] : memref<3x128x128xbf16, #tpu.memory_space<vmem>>, vector<1x128x128xbf16>
    %2 = vector.shape_cast %1 : vector<1x128x128xbf16> to vector<128x128xbf16>
    %cst = arith.constant dense<0.000000e+00> : vector<16x128xf32>
    %3 = tpu.matmul %0, %2, %cst {dimension_numbers = #tpu.dot_dimension_numbers<[1], [0], [0], [1], [0, 0, 1, 1], [], []>} : vector<16x128xbf16>, vector<128x128xbf16>, vector<16x128xf32> -> vector<16x128xf32>
    %c0_4 = arith.constant 0 : index
    %c0_5 = arith.constant 0 : index
    %4 = vector.load %arg6[%c0_4, %c0_5] : memref<10x256xf32, #tpu.memory_space<vmem>>, vector<1x128xf32>
    %5 = vector.broadcast %4 : vector<1x128xf32> to vector<16x128xf32>
    %6 = arith.addf %3, %5 : vector<16x128xf32>
    %cst_6 = arith.constant 0.000000e+00 : f32
    %7 = vector.broadcast %cst_6 : f32 to vector<16x128xf32>
    %8 = arith.maximumf %6, %7 : vector<16x128xf32>
    %9 = arith.truncf %8 : vector<16x128xf32> to vector<16x128xbf16>
    %c0_7 = arith.constant 0 : index
    %c0_8 = arith.constant 0 : index
    %c0_9 = arith.constant 0 : index
    %10 = vector.load %arg3[%c0_7, %c0_8, %c0_9] : memref<2x128x256xbf16, #tpu.memory_space<vmem>>, vector<1x128x256xbf16>
    %11 = vector.shape_cast %10 : vector<1x128x256xbf16> to vector<128x256xbf16>
    %cst_10 = arith.constant dense<0.000000e+00> : vector<16x256xf32>
    %12 = tpu.matmul %9, %11, %cst_10 {dimension_numbers = #tpu.dot_dimension_numbers<[1], [0], [0], [1], [0, 0, 1, 1], [], []>} : vector<16x128xbf16>, vector<128x256xbf16>, vector<16x256xf32> -> vector<16x256xf32>
    %c1 = arith.constant 1 : index
    %c0_11 = arith.constant 0 : index
    %13 = vector.load %arg6[%c1, %c0_11] : memref<10x256xf32, #tpu.memory_space<vmem>>, vector<1x256xf32>
    %14 = vector.broadcast %13 : vector<1x256xf32> to vector<16x256xf32>
    %15 = arith.addf %12, %14 : vector<16x256xf32>
    %cst_12 = arith.constant 0.000000e+00 : f32
    %16 = vector.broadcast %cst_12 : f32 to vector<16x256xf32>
    %17 = arith.maximumf %15, %16 : vector<16x256xf32>
    %18 = arith.truncf %17 : vector<16x256xf32> to vector<16x256xbf16>
    %c0_13 = arith.constant 0 : index
    %c0_14 = arith.constant 0 : index
    %c0_15 = arith.constant 0 : index
    %19 = vector.load %arg4[%c0_13, %c0_14, %c0_15] : memref<3x256x256xbf16, #tpu.memory_space<vmem>>, vector<1x256x256xbf16>
    %20 = vector.shape_cast %19 : vector<1x256x256xbf16> to vector<256x256xbf16>
    %cst_16 = arith.constant dense<0.000000e+00> : vector<16x256xf32>
    %21 = tpu.matmul %18, %20, %cst_16 {dimension_numbers = #tpu.dot_dimension_numbers<[1], [0], [0], [1], [0, 0, 1, 1], [], []>} : vector<16x256xbf16>, vector<256x256xbf16>, vector<16x256xf32> -> vector<16x256xf32>
    %c2 = arith.constant 2 : index
    %c0_17 = arith.constant 0 : index
    %22 = vector.load %arg6[%c2, %c0_17] : memref<10x256xf32, #tpu.memory_space<vmem>>, vector<1x256xf32>
    %23 = vector.broadcast %22 : vector<1x256xf32> to vector<16x256xf32>
    %24 = arith.addf %21, %23 : vector<16x256xf32>
    %c1_18 = arith.constant 1 : index
    %c0_19 = arith.constant 0 : index
    %c0_20 = arith.constant 0 : index
    %25 = vector.load %arg3[%c1_18, %c0_19, %c0_20] : memref<2x128x256xbf16, #tpu.memory_space<vmem>>, vector<1x128x256xbf16>
    %26 = vector.shape_cast %25 : vector<1x128x256xbf16> to vector<128x256xbf16>
    %cst_21 = arith.constant dense<0.000000e+00> : vector<16x256xf32>
    %27 = tpu.matmul %9, %26, %cst_21 {dimension_numbers = #tpu.dot_dimension_numbers<[1], [0], [0], [1], [0, 0, 1, 1], [], []>} : vector<16x128xbf16>, vector<128x256xbf16>, vector<16x256xf32> -> vector<16x256xf32>
    %c3 = arith.constant 3 : index
    %c0_22 = arith.constant 0 : index
    %28 = vector.load %arg6[%c3, %c0_22] : memref<10x256xf32, #tpu.memory_space<vmem>>, vector<1x256xf32>
    %29 = vector.broadcast %28 : vector<1x256xf32> to vector<16x256xf32>
    %30 = arith.addf %27, %29 : vector<16x256xf32>
    %31 = arith.addf %24, %30 : vector<16x256xf32>
    %cst_23 = arith.constant 0.000000e+00 : f32
    %32 = vector.broadcast %cst_23 : f32 to vector<16x256xf32>
    %33 = arith.maximumf %31, %32 : vector<16x256xf32>
    %34 = arith.truncf %33 : vector<16x256xf32> to vector<16x256xbf16>
    %c1_24 = arith.constant 1 : index
    %c0_25 = arith.constant 0 : index
    %c0_26 = arith.constant 0 : index
    %35 = vector.load %arg4[%c1_24, %c0_25, %c0_26] : memref<3x256x256xbf16, #tpu.memory_space<vmem>>, vector<1x256x256xbf16>
    %36 = vector.shape_cast %35 : vector<1x256x256xbf16> to vector<256x256xbf16>
    %cst_27 = arith.constant dense<0.000000e+00> : vector<16x256xf32>
    %37 = tpu.matmul %34, %36, %cst_27 {dimension_numbers = #tpu.dot_dimension_numbers<[1], [0], [0], [1], [0, 0, 1, 1], [], []>} : vector<16x256xbf16>, vector<256x256xbf16>, vector<16x256xf32> -> vector<16x256xf32>
    %c4 = arith.constant 4 : index
    %c0_28 = arith.constant 0 : index
    %38 = vector.load %arg6[%c4, %c0_28] : memref<10x256xf32, #tpu.memory_space<vmem>>, vector<1x256xf32>
    %39 = vector.broadcast %38 : vector<1x256xf32> to vector<16x256xf32>
    %40 = arith.addf %37, %39 : vector<16x256xf32>
    %cst_29 = arith.constant 0.000000e+00 : f32
    %41 = vector.broadcast %cst_29 : f32 to vector<16x256xf32>
    %42 = arith.maximumf %40, %41 : vector<16x256xf32>
    %43 = arith.truncf %42 : vector<16x256xf32> to vector<16x256xbf16>
    %c2_30 = arith.constant 2 : index
    %c0_31 = arith.constant 0 : index
    %c0_32 = arith.constant 0 : index
    %44 = vector.load %arg4[%c2_30, %c0_31, %c0_32] : memref<3x256x256xbf16, #tpu.memory_space<vmem>>, vector<1x256x256xbf16>
    %45 = vector.shape_cast %44 : vector<1x256x256xbf16> to vector<256x256xbf16>
    %cst_33 = arith.constant dense<0.000000e+00> : vector<16x256xf32>
    %46 = tpu.matmul %43, %45, %cst_33 {dimension_numbers = #tpu.dot_dimension_numbers<[1], [0], [0], [1], [0, 0, 1, 1], [], []>} : vector<16x256xbf16>, vector<256x256xbf16>, vector<16x256xf32> -> vector<16x256xf32>
    %c5 = arith.constant 5 : index
    %c0_34 = arith.constant 0 : index
    %47 = vector.load %arg6[%c5, %c0_34] : memref<10x256xf32, #tpu.memory_space<vmem>>, vector<1x256xf32>
    %48 = vector.broadcast %47 : vector<1x256xf32> to vector<16x256xf32>
    %49 = arith.addf %46, %48 : vector<16x256xf32>
    %50 = arith.addf %49, %33 : vector<16x256xf32>
    %cst_35 = arith.constant 0.000000e+00 : f32
    %51 = vector.broadcast %cst_35 : f32 to vector<16x256xf32>
    %52 = arith.maximumf %50, %51 : vector<16x256xf32>
    %53 = arith.truncf %52 : vector<16x256xf32> to vector<16x256xbf16>
    %c0_36 = arith.constant 0 : index
    %c0_37 = arith.constant 0 : index
    %c0_38 = arith.constant 0 : index
    %54 = vector.load %arg5[%c0_36, %c0_37, %c0_38] : memref<2x256x128xbf16, #tpu.memory_space<vmem>>, vector<1x256x128xbf16>
    %55 = vector.shape_cast %54 : vector<1x256x128xbf16> to vector<256x128xbf16>
    %cst_39 = arith.constant dense<0.000000e+00> : vector<16x128xf32>
    %56 = tpu.matmul %53, %55, %cst_39 {dimension_numbers = #tpu.dot_dimension_numbers<[1], [0], [0], [1], [0, 0, 1, 1], [], []>} : vector<16x256xbf16>, vector<256x128xbf16>, vector<16x128xf32> -> vector<16x128xf32>
    %c6 = arith.constant 6 : index
    %c0_40 = arith.constant 0 : index
    %57 = vector.load %arg6[%c6, %c0_40] : memref<10x256xf32, #tpu.memory_space<vmem>>, vector<1x128xf32>
    %58 = vector.broadcast %57 : vector<1x128xf32> to vector<16x128xf32>
    %59 = arith.addf %56, %58 : vector<16x128xf32>
    %cst_41 = arith.constant 0.000000e+00 : f32
    %60 = vector.broadcast %cst_41 : f32 to vector<16x128xf32>
    %61 = arith.maximumf %59, %60 : vector<16x128xf32>
    %62 = arith.truncf %61 : vector<16x128xf32> to vector<16x128xbf16>
    %c1_42 = arith.constant 1 : index
    %c0_43 = arith.constant 0 : index
    %c0_44 = arith.constant 0 : index
    %63 = vector.load %arg2[%c1_42, %c0_43, %c0_44] : memref<3x128x128xbf16, #tpu.memory_space<vmem>>, vector<1x128x128xbf16>
    %64 = vector.shape_cast %63 : vector<1x128x128xbf16> to vector<128x128xbf16>
    %cst_45 = arith.constant dense<0.000000e+00> : vector<16x128xf32>
    %65 = tpu.matmul %62, %64, %cst_45 {dimension_numbers = #tpu.dot_dimension_numbers<[1], [0], [0], [1], [0, 0, 1, 1], [], []>} : vector<16x128xbf16>, vector<128x128xbf16>, vector<16x128xf32> -> vector<16x128xf32>
    %c7 = arith.constant 7 : index
    %c0_46 = arith.constant 0 : index
    %66 = vector.load %arg6[%c7, %c0_46] : memref<10x256xf32, #tpu.memory_space<vmem>>, vector<1x128xf32>
    %67 = vector.broadcast %66 : vector<1x128xf32> to vector<16x128xf32>
    %68 = arith.addf %65, %67 : vector<16x128xf32>
    %c1_47 = arith.constant 1 : index
    %c0_48 = arith.constant 0 : index
    %c0_49 = arith.constant 0 : index
    %69 = vector.load %arg5[%c1_47, %c0_48, %c0_49] : memref<2x256x128xbf16, #tpu.memory_space<vmem>>, vector<1x256x128xbf16>
    %70 = vector.shape_cast %69 : vector<1x256x128xbf16> to vector<256x128xbf16>
    %cst_50 = arith.constant dense<0.000000e+00> : vector<16x128xf32>
    %71 = tpu.matmul %53, %70, %cst_50 {dimension_numbers = #tpu.dot_dimension_numbers<[1], [0], [0], [1], [0, 0, 1, 1], [], []>} : vector<16x256xbf16>, vector<256x128xbf16>, vector<16x128xf32> -> vector<16x128xf32>
    %c8 = arith.constant 8 : index
    %c0_51 = arith.constant 0 : index
    %72 = vector.load %arg6[%c8, %c0_51] : memref<10x256xf32, #tpu.memory_space<vmem>>, vector<1x128xf32>
    %73 = vector.broadcast %72 : vector<1x128xf32> to vector<16x128xf32>
    %74 = arith.addf %71, %73 : vector<16x128xf32>
    %75 = arith.addf %68, %74 : vector<16x128xf32>
    %cst_52 = arith.constant 0.000000e+00 : f32
    %76 = vector.broadcast %cst_52 : f32 to vector<16x128xf32>
    %77 = arith.maximumf %75, %76 : vector<16x128xf32>
    %78 = arith.truncf %77 : vector<16x128xf32> to vector<16x128xbf16>
    %c2_53 = arith.constant 2 : index
    %c0_54 = arith.constant 0 : index
    %c0_55 = arith.constant 0 : index
    %79 = vector.load %arg2[%c2_53, %c0_54, %c0_55] : memref<3x128x128xbf16, #tpu.memory_space<vmem>>, vector<1x128x128xbf16>
    %80 = vector.shape_cast %79 : vector<1x128x128xbf16> to vector<128x128xbf16>
    %cst_56 = arith.constant dense<0.000000e+00> : vector<16x128xf32>
    %81 = tpu.matmul %78, %80, %cst_56 {dimension_numbers = #tpu.dot_dimension_numbers<[1], [0], [0], [1], [0, 0, 1, 1], [], []>} : vector<16x128xbf16>, vector<128x128xbf16>, vector<16x128xf32> -> vector<16x128xf32>
    %c9 = arith.constant 9 : index
    %c0_57 = arith.constant 0 : index
    %82 = vector.load %arg6[%c9, %c0_57] : memref<10x256xf32, #tpu.memory_space<vmem>>, vector<1x128xf32>
    %83 = vector.broadcast %82 : vector<1x128xf32> to vector<16x128xf32>
    %84 = arith.addf %81, %83 : vector<16x128xf32>
    %c0_58 = arith.constant 0 : index
    %c0_59 = arith.constant 0 : index
    %85 = vector.load %arg7[%c0_58, %c0_59] : memref<16x128xf32, #tpu.memory_space<vmem>>, vector<16x128xf32>
    tpu.vector_store %arg7[%c0_58, %c0_59], %84 {strides = array<i32>} : memref<16x128xf32, #tpu.memory_space<vmem>>, vector<16x128xf32>,
    return
  }
  func.func @transform_0(%arg0: i32) -> (i32, i32) {
    %c0_i32 = arith.constant 0 : i32
    %c0_i32_0 = arith.constant 0 : i32
    return %arg0, %c0_i32 : i32, i32
  }
  func.func @transform_1(%arg0: i32) -> (i32, i32, i32) {
    %c0_i32 = arith.constant 0 : i32
    %c0_i32_0 = arith.constant 0 : i32
    %c0_i32_1 = arith.constant 0 : i32
    %c0_i32_2 = arith.constant 0 : i32
    return %c0_i32, %c0_i32_0, %c0_i32_1 : i32, i32, i32
  }
  func.func @transform_2(%arg0: i32) -> (i32, i32, i32) {
    %c0_i32 = arith.constant 0 : i32
    %c0_i32_0 = arith.constant 0 : i32
    %c0_i32_1 = arith.constant 0 : i32
    %c0_i32_2 = arith.constant 0 : i32
    return %c0_i32, %c0_i32_0, %c0_i32_1 : i32, i32, i32
  }
  func.func @transform_3(%arg0: i32) -> (i32, i32, i32) {
    %c0_i32 = arith.constant 0 : i32
    %c0_i32_0 = arith.constant 0 : i32
    %c0_i32_1 = arith.constant 0 : i32
    %c0_i32_2 = arith.constant 0 : i32
    return %c0_i32, %c0_i32_0, %c0_i32_1 : i32, i32, i32
  }
  func.func @transform_4(%arg0: i32) -> (i32, i32, i32) {
    %c0_i32 = arith.constant 0 : i32
    %c0_i32_0 = arith.constant 0 : i32
    %c0_i32_1 = arith.constant 0 : i32
    %c0_i32_2 = arith.constant 0 : i32
    return %c0_i32, %c0_i32_0, %c0_i32_1 : i32, i32, i32
  }
  func.func @transform_5(%arg0: i32) -> (i32, i32) {
    %c0_i32 = arith.constant 0 : i32
    %c0_i32_0 = arith.constant 0 : i32
    %c0_i32_1 = arith.constant 0 : i32
    return %c0_i32, %c0_i32_0 : i32, i32
  }
  func.func @transform_6(%arg0: i32) -> (i32, i32) {
    %c0_i32 = arith.constant 0 : i32
    %c0_i32_0 = arith.constant 0 : i32
    return %arg0, %c0_i32 : i32, i32
  }
}

</mosaic_0001>

<llo_original>
// kernel: keystroke_resnet.1
$region0: #{keystroke_resnet.1}
  #allocation0 [shape = 'u32[]', space=smem, size = 0x4, offset = 0x4, fixed_abs, tag = 'smem constant byte address 0x4 - core index']
  #allocation1 [shape = 'u32[144,128]{1,0:T(1,128)}', space=vmem, size = 0x12000, scoped, tag = 'internal scratch']
  %s0 = inlined_call_operand.vmem [shape: bf16[16,128], index: 0, kind: input, shape index: {}]
  %s1 = inlined_call_operand.hbm [shape: bf16[3,128,128], index: 1, kind: input, shape index: {}]
  %s2 = inlined_call_operand.hbm [shape: bf16[2,128,256], index: 2, kind: input, shape index: {}]
  %s3 = inlined_call_operand.hbm [shape: bf16[3,256,256], index: 3, kind: input, shape index: {}]
  %s4 = inlined_call_operand.hbm [shape: bf16[2,256,128], index: 4, kind: input, shape index: {}]
  %s5 = inlined_call_operand.vmem [shape: f32[10,256], index: 5, kind: input, shape index: {}]
  %s6 = inlined_call_operand.vmem [shape: f32[16,128], index: 6, kind: output, shape index: {}]
  %s7 = sld [smem:[#allocation0]]
  $region50: #{keystroke_resnet.1} parent=0
    _
  %s9 = ssub.s32 1, %s7
  %s10 = scalar_select 0, %s9, %s7
  $region1: #{keystroke_resnet.1} parent=0
    #allocation2 [shape = 'u8[98304]{0}', space=vmem, size = 0x18000, scoped, tag = 'input window, operand 1, single buffered']
    #allocation3 [shape = 's32[1]{0}', space=sflag, size = 0x4, scoped, tag = 'scoped memory for keystroke_resnet.1']
    #allocation4 [shape = 'u8[131072]{0}', space=vmem, size = 0x20000, scoped, tag = 'input window, operand 2, single buffered']
    #allocation5 [shape = 's32[1]{0}', space=sflag, size = 0x4, scoped, tag = 'scoped memory for keystroke_resnet.1']
    #allocation6 [shape = 'u8[393216]{0}', space=vmem, size = 0x60000, scoped, tag = 'input window, operand 3, single buffered']
    #allocation7 [shape = 'u8[131072]{0}', space=vmem, size = 0x20000, scoped, tag = 'input window, operand 4, single buffered']
    #allocation8 [shape = 's32[1]{0}', space=sflag, size = 0x4, scoped, tag = 'scoped memory for keystroke_resnet.1']
    %11 = vsyncpa [#allocation3], 0
    %12 = vsyncpa [#allocation5], 0
    %13 = vsyncpa [#allocation8], 0
    // Predicated region
    $region2: #{keystroke_resnet.1} parent=1 // pred_check
      _
    $region3: #{keystroke_resnet.1} parent=1 // pred_check_branch
      %15 = sbr.rel (0) target = $region5
    $region4: #{keystroke_resnet.1} parent=1 // pred_region
      _
    $region5: #{keystroke_resnet.1} parent=1 // pred_fallthru
      _
    // Predicated region
    $region6: #{keystroke_resnet.1} parent=1 // pred_check
      _
    $region7: #{keystroke_resnet.1} parent=1 // pred_check_branch
      %17 = sbr.rel (0) target = $region9
    $region8: #{keystroke_resnet.1} parent=1 // pred_region
      %s19 = ssub.s32 3072, 3072
      %20 = vsyncadd [#allocation3], %s19
      %s21 = sshll.u32 [#allocation2], 4
      %s22 = int_to_ptr.vmem [resolvable:$true] %s21
      %27 = dma.hbm_to_vmem [thread:$0]  %s1, 3072, %s22, [#allocation3], 64, 64, 4
    $region9: #{keystroke_resnet.1} parent=1 // pred_fallthru
      _
    // Predicated region
    $region10: #{keystroke_resnet.1} parent=1 // pred_check
      _
    $region11: #{keystroke_resnet.1} parent=1 // pred_check_branch
      %29 = sbr.rel (0) target = $region13
    $region12: #{keystroke_resnet.1} parent=1 // pred_region
      %s31 = ssub.s32 4096, 4096
      %32 = vsyncadd [#allocation5], %s31
      %s33 = sshll.u32 [#allocation4], 4
      %s34 = int_to_ptr.vmem [resolvable:$true] %s33
      %39 = dma.hbm_to_vmem [thread:$0]  %s2, 4096, %s34, [#allocation5], 128, 128, 8
    $region13: #{keystroke_resnet.1} parent=1 // pred_fallthru
      _
    // Predicated region
    $region14: #{keystroke_resnet.1} parent=1 // pred_check
      _
    $region15: #{keystroke_resnet.1} parent=1 // pred_check_branch
      %41 = sbr.rel (0) target = $region17
    $region16: #{keystroke_resnet.1} parent=1 // pred_region
      %s43 = ssub.s32 12288, 12288
      %44 = vsyncadd [#allocation5], %s43
      %s45 = sshll.u32 [#allocation6], 4
      %s46 = int_to_ptr.vmem [resolvable:$true] %s45
      %51 = dma.hbm_to_vmem [thread:$0]  %s3, 12288, %s46, [#allocation5], 128, 128, 8
    $region17: #{keystroke_resnet.1} parent=1 // pred_fallthru
      _
    // Predicated region
    $region18: #{keystroke_resnet.1} parent=1 // pred_check
      _
    $region19: #{keystroke_resnet.1} parent=1 // pred_check_branch
      %53 = sbr.rel (0) target = $region21
    $region20: #{keystroke_resnet.1} parent=1 // pred_region
      %s55 = ssub.s32 4096, 4096
      %56 = vsyncadd [#allocation8], %s55
      %s57 = sshll.u32 [#allocation7], 4
      %s58 = int_to_ptr.vmem [resolvable:$true] %s57
      %63 = dma.hbm_to_vmem [thread:$0]  %s4, 4096, %s58, [#allocation8], 64, 64, 4
    $region21: #{keystroke_resnet.1} parent=1 // pred_fallthru
      _
    // Predicated region
    $region22: #{keystroke_resnet.1} parent=1 // pred_check
      _
    $region23: #{keystroke_resnet.1} parent=1 // pred_check_branch
      %65 = sbr.rel (0) target = $region25
    $region24: #{keystroke_resnet.1} parent=1 // pred_region
      _
    $region25: #{keystroke_resnet.1} parent=1 // pred_fallthru
      _
    // Predicated region
    $region26: #{keystroke_resnet.1} parent=1 // pred_check
      _
    $region27: #{keystroke_resnet.1} parent=1 // pred_check_branch
      %67 = sbr.rel (0) target = $region29
    $region28: #{keystroke_resnet.1} parent=1 // pred_region
      %68 = dma.done [#allocation3], 3072
    $region29: #{keystroke_resnet.1} parent=1 // pred_fallthru
      _
    // Predicated region
    $region30: #{keystroke_resnet.1} parent=1 // pred_check
      _
    $region31: #{keystroke_resnet.1} parent=1 // pred_check_branch
      %70 = sbr.rel (0) target = $region33
    $region32: #{keystroke_resnet.1} parent=1 // pred_region
      %71 = dma.done [#allocation5], 4096
    $region33: #{keystroke_resnet.1} parent=1 // pred_fallthru
      _
    // Predicated region
    $region34: #{keystroke_resnet.1} parent=1 // pred_check
      _
    $region35: #{keystroke_resnet.1} parent=1 // pred_check_branch
      %73 = sbr.rel (0) target = $region37
    $region36: #{keystroke_resnet.1} parent=1 // pred_region
      %74 = dma.done [#allocation5], 12288
    $region37: #{keystroke_resnet.1} parent=1 // pred_fallthru
      _
    // Predicated region
    $region38: #{keystroke_resnet.1} parent=1 // pred_check
      _
    $region39: #{keystroke_resnet.1} parent=1 // pred_check_branch
      %76 = sbr.rel (0) target = $region41
    $region40: #{keystroke_resnet.1} parent=1 // pred_region
      %77 = dma.done [#allocation8], 4096
    $region41: #{keystroke_resnet.1} parent=1 // pred_fallthru
      _
    %v79 = vld [vmem:[%s0] sm:$0xf]
    %v80 = vld [vmem:[%s0 + $0x4] sm:$0xf]
    %v81 = vld [vmem:[#allocation2] sm:$0xf]
    %v82 = vld [vmem:[#allocation2 + $0x4] sm:$0xf]
    %v83 = vld [vmem:[#allocation2 + $0x8] sm:$0xf]
    %v84 = vld [vmem:[#allocation2 + $0xc] sm:$0xf]
    %v85 = vld [vmem:[#allocation2 + $0x10] sm:$0xf]
    %v86 = vld [vmem:[#allocation2 + $0x14] sm:$0xf]
    %v87 = vld [vmem:[#allocation2 + $0x18] sm:$0xf]
    %v88 = vld [vmem:[#allocation2 + $0x1c] sm:$0xf]
    %v89 = vld [vmem:[#allocation2 + $0x20] sm:$0xf]
    %v90 = vld [vmem:[#allocation2 + $0x24] sm:$0xf]
    %v91 = vld [vmem:[#allocation2 + $0x28] sm:$0xf]
    %v92 = vld [vmem:[#allocation2 + $0x2c] sm:$0xf]
    %v93 = vld [vmem:[#allocation2 + $0x30] sm:$0xf]
    %v94 = vld [vmem:[#allocation2 + $0x34] sm:$0xf]
    %v95 = vld [vmem:[#allocation2 + $0x38] sm:$0xf]
    %v96 = vld [vmem:[#allocation2 + $0x3c] sm:$0xf]
    %v97 = vld [vmem:[%s5] ss:$0 sm:$0xff]
    %v100 = vunpack.c.l.b16 %v79
    %v101 = vunpack.c.l.b16 %v80
    %v102 = vpack.c.b16 %v101, %v100
    %v120 = vunpack.c.l.b16 %v81
    %v121 = vunpack.c.l.b16 %v82
    %v122 = vunpack.c.l.b16 %v83
    %v123 = vunpack.c.l.b16 %v84
    %v124 = vunpack.c.l.b16 %v85
    %v125 = vunpack.c.l.b16 %v86
    %v126 = vunpack.c.l.b16 %v87
    %v127 = vunpack.c.l.b16 %v88
    %v128 = vunpack.c.l.b16 %v89
    %v129 = vunpack.c.l.b16 %v90
    %v130 = vunpack.c.l.b16 %v91
    %v131 = vunpack.c.l.b16 %v92
    %v132 = vunpack.c.l.b16 %v93
    %v133 = vunpack.c.l.b16 %v94
    %v134 = vunpack.c.l.b16 %v95
    %v135 = vunpack.c.l.b16 %v96
    %v136 = vpack.c.b16 %v121, %v120
    %v137 = vpack.c.b16 %v123, %v122
    %v138 = vpack.c.b16 %v125, %v124
    %v139 = vpack.c.b16 %v127, %v126
    %v140 = vpack.c.b16 %v129, %v128
    %v141 = vpack.c.b16 %v131, %v130
    %v142 = vpack.c.b16 %v133, %v132
    %v143 = vpack.c.b16 %v135, %v134
    %152 = vmatprep.subr.bf16.mxu0 0
    %153 = vmatpush1.bf16.msra.mxu0 %v136
    %154 = vmatprep.subr.bf16.mxu0 0
    %155 = vmatpush1.bf16.msra.mxu0 %v137
    %156 = vmatprep.subr.bf16.mxu0 0
    %157 = vmatpush1.bf16.msra.mxu0 %v138
    %158 = vmatprep.subr.bf16.mxu0 0
    %159 = vmatpush1.bf16.msra.mxu0 %v139
    %160 = vmatprep.subr.bf16.mxu0 0
    %161 = vmatpush1.bf16.msra.mxu0 %v140
    %162 = vmatprep.subr.bf16.mxu0 0
    %163 = vmatpush1.bf16.msra.mxu0 %v141
    %164 = vmatprep.subr.bf16.mxu0 0
    %165 = vmatpush1.bf16.msra.mxu0 %v142
    %166 = vmatprep.subr.bf16.mxu0 0
    %167 = vmatpush1.bf16.msra.mxu0 %v143
    %168 = vmatprep.subr.bf16.mxu0 0
    %169 = vmatpush1.bf16.msra.mxu0 0
    %170 = vmatprep.subr.bf16.mxu0 0
    %171 = vmatpush1.bf16.msra.mxu0 0
    %172 = vmatprep.subr.bf16.mxu0 0
    %173 = vmatpush1.bf16.msra.mxu0 0
    %174 = vmatprep.subr.bf16.mxu0 0
    %175 = vmatpush1.bf16.msra.mxu0 0
    %176 = vmatprep.subr.bf16.mxu0 0
    %177 = vmatpush1.bf16.msra.mxu0 0
    %178 = vmatprep.subr.bf16.mxu0 0
    %179 = vmatpush1.bf16.msra.mxu0 0
    %180 = vmatprep.subr.bf16.mxu0 0
    %181 = vmatpush1.bf16.msra.mxu0 0
    %182 = vmatprep.subr.bf16.mxu0 0
    %183 = vmatpush1.bf16.msra.mxu0 0
    %184 = vmatprep.mubr.bf16.mxu0 0
    %185 = vmatmul.mubr.bf16.gmra.mrb[0].mxu0 %v102
    %v186 = vpop.f32.mrb[0].mxu0
    %v187 = vadd.f32 %v97, %v186
    %v188 = vpop.f32.mrb[0].mxu0
    %v189 = vpop.f32.mrb[0].mxu0
    %v190 = vadd.f32 %v97, %v189
    %v191 = vpop.f32.mrb[0].mxu0
    %192 = vdwg.mxu0
    %v193 = vmax.f32 %v187, 0.0
    %v194 = vmax.f32 %v190, 0.0
    %v195 = vpack.c.bf16 %v194, %v193
    %v196 = vld [vmem:[#allocation4] sm:$0xff]
    %v197 = vld [vmem:[#allocation4 + $0x8] sm:$0xff]
    %v198 = vld [vmem:[#allocation4 + $0x10] sm:$0xff]
    %v199 = vld [vmem:[#allocation4 + $0x18] sm:$0xff]
    %v200 = vld [vmem:[#allocation4 + $0x20] sm:$0xff]
    %v201 = vld [vmem:[#allocation4 + $0x28] sm:$0xff]
    %v202 = vld [vmem:[#allocation4 + $0x30] sm:$0xff]
    %v203 = vld [vmem:[#allocation4 + $0x38] sm:$0xff]
    %v204 = vld [vmem:[#allocation4 + $0x40] sm:$0xff]
    %v205 = vld [vmem:[#allocation4 + $0x48] sm:$0xff]
    %v206 = vld [vmem:[#allocation4 + $0x50] sm:$0xff]
    %v207 = vld [vmem:[#allocation4 + $0x58] sm:$0xff]
    %v208 = vld [vmem:[#allocation4 + $0x60] sm:$0xff]
    %v209 = vld [vmem:[#allocation4 + $0x68] sm:$0xff]
    %v210 = vld [vmem:[#allocation4 + $0x70] sm:$0xff]
    %v211 = vld [vmem:[#allocation4 + $0x78] sm:$0xff]
    %s212 = scalar_lea.vmem %s5, 1
    %v213 = vld [vmem:[%s212] ss:$8 sm:$0x3]
    %v215 = vlaneseq
    %v216 = vshrl.u32 %v215, 7
    %v217 = vsub.s32 0, %v216
    %v218 = vrot.slane %v213, %v217
    %v219 = vlaneseq
    %v220 = vshrl.u32 %v219, 7
    %v221 = vsub.s32 1, %v220
    %v222 = vrot.slane %v213, %v221
    %v241 = vunpack.c.l.b16 %v196
    %v242 = vunpack.c.h.b16 %v196
    %v243 = vunpack.c.l.b16 %v197
    %v244 = vunpack.c.h.b16 %v197
    %v245 = vunpack.c.l.b16 %v198
    %v246 = vunpack.c.h.b16 %v198
    %v247 = vunpack.c.l.b16 %v199
    %v248 = vunpack.c.h.b16 %v199
    %v249 = vunpack.c.l.b16 %v200
    %v250 = vunpack.c.h.b16 %v200
    %v251 = vunpack.c.l.b16 %v201
    %v252 = vunpack.c.h.b16 %v201
    %v253 = vunpack.c.l.b16 %v202
    %v254 = vunpack.c.h.b16 %v202
    %v255 = vunpack.c.l.b16 %v203
    %v256 = vunpack.c.h.b16 %v203
    %v257 = vunpack.c.l.b16 %v204
    %v258 = vunpack.c.h.b16 %v204
    %v259 = vunpack.c.l.b16 %v205
    %v260 = vunpack.c.h.b16 %v205
    %v261 = vunpack.c.l.b16 %v206
    %v262 = vunpack.c.h.b16 %v206
    %v263 = vunpack.c.l.b16 %v207
    %v264 = vunpack.c.h.b16 %v207
    %v265 = vunpack.c.l.b16 %v208
    %v266 = vunpack.c.h.b16 %v208
    %v267 = vunpack.c.l.b16 %v209
    %v268 = vunpack.c.h.b16 %v209
    %v269 = vunpack.c.l.b16 %v210
    %v270 = vunpack.c.h.b16 %v210
    %v271 = vunpack.c.l.b16 %v211
    %v272 = vunpack.c.h.b16 %v211
    %v273 = vpack.c.b16 %v243, %v241
    %v274 = vpack.c.b16 %v244, %v242
    %v275 = vpack.c.b16 %v247, %v245
    %v276 = vpack.c.b16 %v248, %v246
    %v277 = vpack.c.b16 %v251, %v249
    %v278 = vpack.c.b16 %v252, %v250
    %v279 = vpack.c.b16 %v255, %v253
    %v280 = vpack.c.b16 %v256, %v254
    %v281 = vpack.c.b16 %v259, %v257
    %v282 = vpack.c.b16 %v260, %v258
    %v283 = vpack.c.b16 %v263, %v261
    %v284 = vpack.c.b16 %v264, %v262
    %v285 = vpack.c.b16 %v267, %v265
    %v286 = vpack.c.b16 %v268, %v266
    %v287 = vpack.c.b16 %v271, %v269
    %v288 = vpack.c.b16 %v272, %v270
    %305 = vmatprep.subr.bf16.mxu0 %v274
    %306 = vmatpush1.bf16.msra.mxu0 %v273
    %307 = vmatprep.subr.bf16.mxu0 %v276
    %308 = vmatpush1.bf16.msra.mxu0 %v275
    %309 = vmatprep.subr.bf16.mxu0 %v278
    %310 = vmatpush1.bf16.msra.mxu0 %v277
    %311 = vmatprep.subr.bf16.mxu0 %v280
    %312 = vmatpush1.bf16.msra.mxu0 %v279
    %313 = vmatprep.subr.bf16.mxu0 %v282
    %314 = vmatpush1.bf16.msra.mxu0 %v281
    %315 = vmatprep.subr.bf16.mxu0 %v284
    %316 = vmatpush1.bf16.msra.mxu0 %v283
    %317 = vmatprep.subr.bf16.mxu0 %v286
    %318 = vmatpush1.bf16.msra.mxu0 %v285
    %319 = vmatprep.subr.bf16.mxu0 %v288
    %320 = vmatpush1.bf16.msra.mxu0 %v287
    %321 = vmatprep.subr.bf16.mxu0 0
    %322 = vmatpush1.bf16.msra.mxu0 0
    %323 = vmatprep.subr.bf16.mxu0 0
    %324 = vmatpush1.bf16.msra.mxu0 0
    %325 = vmatprep.subr.bf16.mxu0 0
    %326 = vmatpush1.bf16.msra.mxu0 0
    %327 = vmatprep.subr.bf16.mxu0 0
    %328 = vmatpush1.bf16.msra.mxu0 0
    %329 = vmatprep.subr.bf16.mxu0 0
    %330 = vmatpush1.bf16.msra.mxu0 0
    %331 = vmatprep.subr.bf16.mxu0 0
    %332 = vmatpush1.bf16.msra.mxu0 0
    %333 = vmatprep.subr.bf16.mxu0 0
    %334 = vmatpush1.bf16.msra.mxu0 0
    %335 = vmatprep.subr.bf16.mxu0 0
    %336 = vmatpush1.bf16.msra.mxu0 0
    %337 = vmatprep.mubr.bf16.mxu0 0
    %338 = vmatmul.mubr.bf16.gmra.mrb[0].mxu0 %v195
    %v339 = vpop.f32.mrb[0].mxu0
    %v340 = vadd.f32 %v218, %v339
    %v341 = vpop.f32.mrb[0].mxu0
    %v342 = vadd.f32 %v222, %v341
    %v343 = vpop.f32.mrb[0].mxu0
    %v344 = vadd.f32 %v218, %v343
    %v345 = vpop.f32.mrb[0].mxu0
    %v346 = vadd.f32 %v222, %v345
    %347 = vdwg.mxu0
    %v348 = vmax.f32 %v340, 0.0
    %v349 = vmax.f32 %v342, 0.0
    %v350 = vmax.f32 %v344, 0.0
    %v351 = vmax.f32 %v346, 0.0
    %v352 = vpack.c.bf16 %v350, %v348
    %v353 = vpack.c.bf16 %v351, %v349
    %v354 = vld [vmem:[#allocation6] sm:$0xff]
    %v355 = vld [vmem:[#allocation6 + $0x8] sm:$0xff]
    %v356 = vld [vmem:[#allocation6 + $0x10] sm:$0xff]
    %v357 = vld [vmem:[#allocation6 + $0x18] sm:$0xff]
    %v358 = vld [vmem:[#allocation6 + $0x20] sm:$0xff]
    %v359 = vld [vmem:[#allocation6 + $0x28] sm:$0xff]
    %v360 = vld [vmem:[#allocation6 + $0x30] sm:$0xff]
    %v361 = vld [vmem:[#allocation6 + $0x38] sm:$0xff]
    %v362 = vld [vmem:[#allocation6 + $0x40] sm:$0xff]
    %v363 = vld [vmem:[#allocation6 + $0x48] sm:$0xff]
    %v364 = vld [vmem:[#allocation6 + $0x50] sm:$0xff]
    %v365 = vld [vmem:[#allocation6 + $0x58] sm:$0xff]
    %v366 = vld [vmem:[#allocation6 + $0x60] sm:$0xff]
    %v367 = vld [vmem:[#allocation6 + $0x68] sm:$0xff]
    %v368 = vld [vmem:[#allocation6 + $0x70] sm:$0xff]
    %v369 = vld [vmem:[#allocation6 + $0x78] sm:$0xff]
    %v370 = vld [vmem:[#allocation6 + $0x80] sm:$0xff]
    %v371 = vld [vmem:[#allocation6 + $0x88] sm:$0xff]
    %v372 = vld [vmem:[#allocation6 + $0x90] sm:$0xff]
    %v373 = vld [vmem:[#allocation6 + $0x98] sm:$0xff]
    %v374 = vld [vmem:[#allocation6 + $0xa0] sm:$0xff]
    %v375 = vld [vmem:[#allocation6 + $0xa8] sm:$0xff]
    %v376 = vld [vmem:[#allocation6 + $0xb0] sm:$0xff]
    %v377 = vld [vmem:[#allocation6 + $0xb8] sm:$0xff]
    %v378 = vld [vmem:[#allocation6 + $0xc0] sm:$0xff]
    %v379 = vld [vmem:[#allocation6 + $0xc8] sm:$0xff]
    %v380 = vld [vmem:[#allocation6 + $0xd0] sm:$0xff]
    %v381 = vld [vmem:[#allocation6 + $0xd8] sm:$0xff]
    %v382 = vld [vmem:[#allocation6 + $0xe0] sm:$0xff]
    %v383 = vld [vmem:[#allocation6 + $0xe8] sm:$0xff]
    %v384 = vld [vmem:[#allocation6 + $0xf0] sm:$0xff]
    %v385 = vld [vmem:[#allocation6 + $0xf8] sm:$0xff]
    %s386 = scalar_lea.vmem %s5, 2
    %v387 = vld [vmem:[%s386] ss:$8 sm:$0x3]
    %v389 = vlaneseq
    %v390 = vshrl.u32 %v389, 7
    %v391 = vsub.s32 0, %v390
    %v392 = vrot.slane %v387, %v391
    %v393 = vlaneseq
    %v394 = vshrl.u32 %v393, 7
    %v395 = vsub.s32 1, %v394
    %v396 = vrot.slane %v387, %v395
    %v431 = vunpack.c.l.b16 %v354
    %v432 = vunpack.c.h.b16 %v354
    %v433 = vunpack.c.l.b16 %v355
    %v434 = vunpack.c.h.b16 %v355
    %v435 = vunpack.c.l.b16 %v356
    %v436 = vunpack.c.h.b16 %v356
    %v437 = vunpack.c.l.b16 %v357
    %v438 = vunpack.c.h.b16 %v357
    %v439 = vunpack.c.l.b16 %v358
    %v440 = vunpack.c.h.b16 %v358
    %v441 = vunpack.c.l.b16 %v359
    %v442 = vunpack.c.h.b16 %v359
    %v443 = vunpack.c.l.b16 %v360
    %v444 = vunpack.c.h.b16 %v360
    %v445 = vunpack.c.l.b16 %v361
    %v446 = vunpack.c.h.b16 %v361
    %v447 = vunpack.c.l.b16 %v362
    %v448 = vunpack.c.h.b16 %v362
    %v449 = vunpack.c.l.b16 %v363
    %v450 = vunpack.c.h.b16 %v363
    %v451 = vunpack.c.l.b16 %v364
    %v452 = vunpack.c.h.b16 %v364
    %v453 = vunpack.c.l.b16 %v365
    %v454 = vunpack.c.h.b16 %v365
    %v455 = vunpack.c.l.b16 %v366
    %v456 = vunpack.c.h.b16 %v366
    %v457 = vunpack.c.l.b16 %v367
    %v458 = vunpack.c.h.b16 %v367
    %v459 = vunpack.c.l.b16 %v368
    %v460 = vunpack.c.h.b16 %v368
    %v461 = vunpack.c.l.b16 %v369
    %v462 = vunpack.c.h.b16 %v369
    %v463 = vunpack.c.l.b16 %v370
    %v464 = vunpack.c.h.b16 %v370
    %v465 = vunpack.c.l.b16 %v371
    %v466 = vunpack.c.h.b16 %v371
    %v467 = vunpack.c.l.b16 %v372
    %v468 = vunpack.c.h.b16 %v372
    %v469 = vunpack.c.l.b16 %v373
    %v470 = vunpack.c.h.b16 %v373
    %v471 = vunpack.c.l.b16 %v374
    %v472 = vunpack.c.h.b16 %v374
    %v473 = vunpack.c.l.b16 %v375
    %v474 = vunpack.c.h.b16 %v375
    %v475 = vunpack.c.l.b16 %v376
    %v476 = vunpack.c.h.b16 %v376
    %v477 = vunpack.c.l.b16 %v377
    %v478 = vunpack.c.h.b16 %v377
    %v479 = vunpack.c.l.b16 %v378
    %v480 = vunpack.c.h.b16 %v378
    %v481 = vunpack.c.l.b16 %v379
    %v482 = vunpack.c.h.b16 %v379
    %v483 = vunpack.c.l.b16 %v380
    %v484 = vunpack.c.h.b16 %v380
    %v485 = vunpack.c.l.b16 %v381
    %v486 = vunpack.c.h.b16 %v381
    %v487 = vunpack.c.l.b16 %v382
    %v488 = vunpack.c.h.b16 %v382
    %v489 = vunpack.c.l.b16 %v383
    %v490 = vunpack.c.h.b16 %v383
    %v491 = vunpack.c.l.b16 %v384
    %v492 = vunpack.c.h.b16 %v384
    %v493 = vunpack.c.l.b16 %v385
    %v494 = vunpack.c.h.b16 %v385
    %v495 = vpack.c.b16 %v433, %v431
    %v496 = vpack.c.b16 %v434, %v432
    %v497 = vpack.c.b16 %v437, %v435
    %v498 = vpack.c.b16 %v438, %v436
    %v499 = vpack.c.b16 %v441, %v439
    %v500 = vpack.c.b16 %v442, %v440
    %v501 = vpack.c.b16 %v445, %v443
    %v502 = vpack.c.b16 %v446, %v444
    %v503 = vpack.c.b16 %v449, %v447
    %v504 = vpack.c.b16 %v450, %v448
    %v505 = vpack.c.b16 %v453, %v451
    %v506 = vpack.c.b16 %v454, %v452
    %v507 = vpack.c.b16 %v457, %v455
    %v508 = vpack.c.b16 %v458, %v456
    %v509 = vpack.c.b16 %v461, %v459
    %v510 = vpack.c.b16 %v462, %v460
    %v511 = vpack.c.b16 %v465, %v463
    %v512 = vpack.c.b16 %v466, %v464
    %v513 = vpack.c.b16 %v469, %v467
    %v514 = vpack.c.b16 %v470, %v468
    %v515 = vpack.c.b16 %v473, %v471
    %v516 = vpack.c.b16 %v474, %v472
    %v517 = vpack.c.b16 %v477, %v475
    %v518 = vpack.c.b16 %v478, %v476
    %v519 = vpack.c.b16 %v481, %v479
    %v520 = vpack.c.b16 %v482, %v480
    %v521 = vpack.c.b16 %v485, %v483
    %v522 = vpack.c.b16 %v486, %v484
    %v523 = vpack.c.b16 %v489, %v487
    %v524 = vpack.c.b16 %v490, %v488
    %v525 = vpack.c.b16 %v493, %v491
    %v526 = vpack.c.b16 %v494, %v492
    %559 = vmatprep.subr.bf16.mxu0 %v496
    %560 = vmatpush1.bf16.msra.mxu0 %v495
    %561 = vmatprep.subr.bf16.mxu0 %v498
    %562 = vmatpush1.bf16.msra.mxu0 %v497
    %563 = vmatprep.subr.bf16.mxu0 %v500
    %564 = vmatpush1.bf16.msra.mxu0 %v499
    %565 = vmatprep.subr.bf16.mxu0 %v502
    %566 = vmatpush1.bf16.msra.mxu0 %v501
    %567 = vmatprep.subr.bf16.mxu0 %v504
    %568 = vmatpush1.bf16.msra.mxu0 %v503
    %569 = vmatprep.subr.bf16.mxu0 %v506
    %570 = vmatpush1.bf16.msra.mxu0 %v505
    %571 = vmatprep.subr.bf16.mxu0 %v508
    %572 = vmatpush1.bf16.msra.mxu0 %v507
    %573 = vmatprep.subr.bf16.mxu0 %v510
    %574 = vmatpush1.bf16.msra.mxu0 %v509
    %575 = vmatprep.subr.bf16.mxu0 %v512
    %576 = vmatpush1.bf16.msra.mxu0 %v511
    %577 = vmatprep.subr.bf16.mxu0 %v514
    %578 = vmatpush1.bf16.msra.mxu0 %v513
    %579 = vmatprep.subr.bf16.mxu0 %v516
    %580 = vmatpush1.bf16.msra.mxu0 %v515
    %581 = vmatprep.subr.bf16.mxu0 %v518
    %582 = vmatpush1.bf16.msra.mxu0 %v517
    %583 = vmatprep.subr.bf16.mxu0 %v520
    %584 = vmatpush1.bf16.msra.mxu0 %v519
    %585 = vmatprep.subr.bf16.mxu0 %v522
    %586 = vmatpush1.bf16.msra.mxu0 %v521
    %587 = vmatprep.subr.bf16.mxu0 %v524
    %588 = vmatpush1.bf16.msra.mxu0 %v523
    %589 = vmatprep.subr.bf16.mxu0 %v526
    %590 = vmatpush1.bf16.msra.mxu0 %v525
    %591 = vmatprep.mubr.bf16.mxu0 %v353
    %592 = vmatmul.mubr.bf16.gmra.mrb[0].mxu0 %v352
    %v593 = vpop.f32.mrb[0].mxu0
    %v594 = vadd.f32 %v392, %v593
    %v595 = vpop.f32.mrb[0].mxu0
    %v596 = vadd.f32 %v396, %v595
    %v597 = vpop.f32.mrb[0].mxu0
    %v598 = vadd.f32 %v392, %v597
    %v599 = vpop.f32.mrb[0].mxu0
    %v600 = vadd.f32 %v396, %v599
    %601 = vdwg.mxu0
    %s602 = scalar_lea.vmem [#allocation4], 128
    %v603 = vld [vmem:[%s602] sm:$0xff]
    %v604 = vld [vmem:[%s602 + $0x8] sm:$0xff]
    %v605 = vld [vmem:[%s602 + $0x10] sm:$0xff]
    %v606 = vld [vmem:[%s602 + $0x18] sm:$0xff]
    %v607 = vld [vmem:[%s602 + $0x20] sm:$0xff]
    %v608 = vld [vmem:[%s602 + $0x28] sm:$0xff]
    %v609 = vld [vmem:[%s602 + $0x30] sm:$0xff]
    %v610 = vld [vmem:[%s602 + $0x38] sm:$0xff]
    %v611 = vld [vmem:[%s602 + $0x40] sm:$0xff]
    %v612 = vld [vmem:[%s602 + $0x48] sm:$0xff]
    %v613 = vld [vmem:[%s602 + $0x50] sm:$0xff]
    %v614 = vld [vmem:[%s602 + $0x58] sm:$0xff]
    %v615 = vld [vmem:[%s602 + $0x60] sm:$0xff]
    %v616 = vld [vmem:[%s602 + $0x68] sm:$0xff]
    %v617 = vld [vmem:[%s602 + $0x70] sm:$0xff]
    %v618 = vld [vmem:[%s602 + $0x78] sm:$0xff]
    %s619 = scalar_lea.vmem %s5, 3
    %v620 = vld [vmem:[%s619] ss:$8 sm:$0x3]
    %v622 = vlaneseq
    %v623 = vshrl.u32 %v622, 7
    %v624 = vsub.s32 0, %v623
    %v625 = vrot.slane %v620, %v624
    %v626 = vlaneseq
    %v627 = vshrl.u32 %v626, 7
    %v628 = vsub.s32 1, %v627
    %v629 = vrot.slane %v620, %v628
    %v648 = vunpack.c.l.b16 %v603
    %v649 = vunpack.c.h.b16 %v603
    %v650 = vunpack.c.l.b16 %v604
    %v651 = vunpack.c.h.b16 %v604
    %v652 = vunpack.c.l.b16 %v605
    %v653 = vunpack.c.h.b16 %v605
    %v654 = vunpack.c.l.b16 %v606
    %v655 = vunpack.c.h.b16 %v606
    %v656 = vunpack.c.l.b16 %v607
    %v657 = vunpack.c.h.b16 %v607
    %v658 = vunpack.c.l.b16 %v608
    %v659 = vunpack.c.h.b16 %v608
    %v660 = vunpack.c.l.b16 %v609
    %v661 = vunpack.c.h.b16 %v609
    %v662 = vunpack.c.l.b16 %v610
    %v663 = vunpack.c.h.b16 %v610
    %v664 = vunpack.c.l.b16 %v611
    %v665 = vunpack.c.h.b16 %v611
    %v666 = vunpack.c.l.b16 %v612
    %v667 = vunpack.c.h.b16 %v612
    %v668 = vunpack.c.l.b16 %v613
    %v669 = vunpack.c.h.b16 %v613
    %v670 = vunpack.c.l.b16 %v614
    %v671 = vunpack.c.h.b16 %v614
    %v672 = vunpack.c.l.b16 %v615
    %v673 = vunpack.c.h.b16 %v615
    %v674 = vunpack.c.l.b16 %v616
    %v675 = vunpack.c.h.b16 %v616
    %v676 = vunpack.c.l.b16 %v617
    %v677 = vunpack.c.h.b16 %v617
    %v678 = vunpack.c.l.b16 %v618
    %v679 = vunpack.c.h.b16 %v618
    %v680 = vpack.c.b16 %v650, %v648
    %v681 = vpack.c.b16 %v651, %v649
    %v682 = vpack.c.b16 %v654, %v652
    %v683 = vpack.c.b16 %v655, %v653
    %v684 = vpack.c.b16 %v658, %v656
    %v685 = vpack.c.b16 %v659, %v657
    %v686 = vpack.c.b16 %v662, %v660
    %v687 = vpack.c.b16 %v663, %v661
    %v688 = vpack.c.b16 %v666, %v664
    %v689 = vpack.c.b16 %v667, %v665
    %v690 = vpack.c.b16 %v670, %v668
    %v691 = vpack.c.b16 %v671, %v669
    %v692 = vpack.c.b16 %v674, %v672
    %v693 = vpack.c.b16 %v675, %v673
    %v694 = vpack.c.b16 %v678, %v676
    %v695 = vpack.c.b16 %v679, %v677
    %712 = vmatprep.subr.bf16.mxu0 %v681
    %713 = vmatpush1.bf16.msra.mxu0 %v680
    %714 = vmatprep.subr.bf16.mxu0 %v683
    %715 = vmatpush1.bf16.msra.mxu0 %v682
    %716 = vmatprep.subr.bf16.mxu0 %v685
    %717 = vmatpush1.bf16.msra.mxu0 %v684
    %718 = vmatprep.subr.bf16.mxu0 %v687
    %719 = vmatpush1.bf16.msra.mxu0 %v686
    %720 = vmatprep.subr.bf16.mxu0 %v689
    %721 = vmatpush1.bf16.msra.mxu0 %v688
    %722 = vmatprep.subr.bf16.mxu0 %v691
    %723 = vmatpush1.bf16.msra.mxu0 %v690
    %724 = vmatprep.subr.bf16.mxu0 %v693
    %725 = vmatpush1.bf16.msra.mxu0 %v692
    %726 = vmatprep.subr.bf16.mxu0 %v695
    %727 = vmatpush1.bf16.msra.mxu0 %v694
    %728 = vmatprep.subr.bf16.mxu0 0
    %729 = vmatpush1.bf16.msra.mxu0 0
    %730 = vmatprep.subr.bf16.mxu0 0
    %731 = vmatpush1.bf16.msra.mxu0 0
    %732 = vmatprep.subr.bf16.mxu0 0
    %733 = vmatpush1.bf16.msra.mxu0 0
    %734 = vmatprep.subr.bf16.mxu0 0
    %735 = vmatpush1.bf16.msra.mxu0 0
    %736 = vmatprep.subr.bf16.mxu0 0
    %737 = vmatpush1.bf16.msra.mxu0 0
    %738 = vmatprep.subr.bf16.mxu0 0
    %739 = vmatpush1.bf16.msra.mxu0 0
    %740 = vmatprep.subr.bf16.mxu0 0
    %741 = vmatpush1.bf16.msra.mxu0 0
    %742 = vmatprep.subr.bf16.mxu0 0
    %743 = vmatpush1.bf16.msra.mxu0 0
    %744 = vmatprep.mubr.bf16.mxu0 0
    %745 = vmatmul.mubr.bf16.gmra.mrb[0].mxu0 %v195
    %v746 = vpop.f32.mrb[0].mxu0
    %v747 = vadd.f32 %v625, %v746
    %v748 = vpop.f32.mrb[0].mxu0
    %v749 = vadd.f32 %v629, %v748
    %v750 = vpop.f32.mrb[0].mxu0
    %v751 = vadd.f32 %v625, %v750
    %v752 = vpop.f32.mrb[0].mxu0
    %v753 = vadd.f32 %v629, %v752
    %754 = vdwg.mxu0
    %v755 = vadd.f32 %v594, %v747
    %v756 = vadd.f32 %v596, %v749
    %v757 = vadd.f32 %v598, %v751
    %v758 = vadd.f32 %v600, %v753
    %v759 = vmax.f32 %v755, 0.0
    %v760 = vmax.f32 %v756, 0.0
    %v761 = vmax.f32 %v757, 0.0
    %v762 = vmax.f32 %v758, 0.0
    %v763 = vpack.c.bf16 %v761, %v759
    %v764 = vpack.c.bf16 %v762, %v760
    %s765 = scalar_lea.vmem [#allocation6], 256
    %v766 = vld [vmem:[%s765] sm:$0xff]
    %v767 = vld [vmem:[%s765 + $0x8] sm:$0xff]
    %v768 = vld [vmem:[%s765 + $0x10] sm:$0xff]
    %v769 = vld [vmem:[%s765 + $0x18] sm:$0xff]
    %v770 = vld [vmem:[%s765 + $0x20] sm:$0xff]
    %v771 = vld [vmem:[%s765 + $0x28] sm:$0xff]
    %v772 = vld [vmem:[%s765 + $0x30] sm:$0xff]
    %v773 = vld [vmem:[%s765 + $0x38] sm:$0xff]
    %v774 = vld [vmem:[%s765 + $0x40] sm:$0xff]
    %v775 = vld [vmem:[%s765 + $0x48] sm:$0xff]
    %v776 = vld [vmem:[%s765 + $0x50] sm:$0xff]
    %v777 = vld [vmem:[%s765 + $0x58] sm:$0xff]
    %v778 = vld [vmem:[%s765 + $0x60] sm:$0xff]
    %v779 = vld [vmem:[%s765 + $0x68] sm:$0xff]
    %v780 = vld [vmem:[%s765 + $0x70] sm:$0xff]
    %v781 = vld [vmem:[%s765 + $0x78] sm:$0xff]
    %v782 = vld [vmem:[%s765 + $0x80] sm:$0xff]
    %v783 = vld [vmem:[%s765 + $0x88] sm:$0xff]
    %v784 = vld [vmem:[%s765 + $0x90] sm:$0xff]
    %v785 = vld [vmem:[%s765 + $0x98] sm:$0xff]
    %v786 = vld [vmem:[%s765 + $0xa0] sm:$0xff]
    %v787 = vld [vmem:[%s765 + $0xa8] sm:$0xff]
    %v788 = vld [vmem:[%s765 + $0xb0] sm:$0xff]
    %v789 = vld [vmem:[%s765 + $0xb8] sm:$0xff]
    %v790 = vld [vmem:[%s765 + $0xc0] sm:$0xff]
    %v791 = vld [vmem:[%s765 + $0xc8] sm:$0xff]
    %v792 = vld [vmem:[%s765 + $0xd0] sm:$0xff]
    %v793 = vld [vmem:[%s765 + $0xd8] sm:$0xff]
    %v794 = vld [vmem:[%s765 + $0xe0] sm:$0xff]
    %v795 = vld [vmem:[%s765 + $0xe8] sm:$0xff]
    %v796 = vld [vmem:[%s765 + $0xf0] sm:$0xff]
    %v797 = vld [vmem:[%s765 + $0xf8] sm:$0xff]
    %s798 = scalar_lea.vmem %s5, 4
    %v799 = vld [vmem:[%s798] ss:$8 sm:$0x3]
    %v801 = vlaneseq
    %v802 = vshrl.u32 %v801, 7
    %v803 = vsub.s32 0, %v802
    %v804 = vrot.slane %v799, %v803
    %v805 = vlaneseq
    %v806 = vshrl.u32 %v805, 7
    %v807 = vsub.s32 1, %v806
    %v808 = vrot.slane %v799, %v807
    %v843 = vunpack.c.l.b16 %v766
    %v844 = vunpack.c.h.b16 %v766
    %v845 = vunpack.c.l.b16 %v767
    %v846 = vunpack.c.h.b16 %v767
    %v847 = vunpack.c.l.b16 %v768
    %v848 = vunpack.c.h.b16 %v768
    %v849 = vunpack.c.l.b16 %v769
    %v850 = vunpack.c.h.b16 %v769
    %v851 = vunpack.c.l.b16 %v770
    %v852 = vunpack.c.h.b16 %v770
    %v853 = vunpack.c.l.b16 %v771
    %v854 = vunpack.c.h.b16 %v771
    %v855 = vunpack.c.l.b16 %v772
    %v856 = vunpack.c.h.b16 %v772
    %v857 = vunpack.c.l.b16 %v773
    %v858 = vunpack.c.h.b16 %v773
    %v859 = vunpack.c.l.b16 %v774
    %v860 = vunpack.c.h.b16 %v774
    %v861 = vunpack.c.l.b16 %v775
    %v862 = vunpack.c.h.b16 %v775
    %v863 = vunpack.c.l.b16 %v776
    %v864 = vunpack.c.h.b16 %v776
    %v865 = vunpack.c.l.b16 %v777
    %v866 = vunpack.c.h.b16 %v777
    %v867 = vunpack.c.l.b16 %v778
    %v868 = vunpack.c.h.b16 %v778
    %v869 = vunpack.c.l.b16 %v779
    %v870 = vunpack.c.h.b16 %v779
    %v871 = vunpack.c.l.b16 %v780
    %v872 = vunpack.c.h.b16 %v780
    %v873 = vunpack.c.l.b16 %v781
    %v874 = vunpack.c.h.b16 %v781
    %v875 = vunpack.c.l.b16 %v782
    %v876 = vunpack.c.h.b16 %v782
    %v877 = vunpack.c.l.b16 %v783
    %v878 = vunpack.c.h.b16 %v783
    %v879 = vunpack.c.l.b16 %v784
    %v880 = vunpack.c.h.b16 %v784
    %v881 = vunpack.c.l.b16 %v785
    %v882 = vunpack.c.h.b16 %v785
    %v883 = vunpack.c.l.b16 %v786
    %v884 = vunpack.c.h.b16 %v786
    %v885 = vunpack.c.l.b16 %v787
    %v886 = vunpack.c.h.b16 %v787
    %v887 = vunpack.c.l.b16 %v788
    %v888 = vunpack.c.h.b16 %v788
    %v889 = vunpack.c.l.b16 %v789
    %v890 = vunpack.c.h.b16 %v789
    %v891 = vunpack.c.l.b16 %v790
    %v892 = vunpack.c.h.b16 %v790
    %v893 = vunpack.c.l.b16 %v791
    %v894 = vunpack.c.h.b16 %v791
    %v895 = vunpack.c.l.b16 %v792
    %v896 = vunpack.c.h.b16 %v792
    %v897 = vunpack.c.l.b16 %v793
    %v898 = vunpack.c.h.b16 %v793
    %v899 = vunpack.c.l.b16 %v794
    %v900 = vunpack.c.h.b16 %v794
    %v901 = vunpack.c.l.b16 %v795
    %v902 = vunpack.c.h.b16 %v795
    %v903 = vunpack.c.l.b16 %v796
    %v904 = vunpack.c.h.b16 %v796
    %v905 = vunpack.c.l.b16 %v797
    %v906 = vunpack.c.h.b16 %v797
    %v907 = vpack.c.b16 %v845, %v843
    %v908 = vpack.c.b16 %v846, %v844
    %v909 = vpack.c.b16 %v849, %v847
    %v910 = vpack.c.b16 %v850, %v848
    %v911 = vpack.c.b16 %v853, %v851
    %v912 = vpack.c.b16 %v854, %v852
    %v913 = vpack.c.b16 %v857, %v855
    %v914 = vpack.c.b16 %v858, %v856
    %v915 = vpack.c.b16 %v861, %v859
    %v916 = vpack.c.b16 %v862, %v860
    %v917 = vpack.c.b16 %v865, %v863
    %v918 = vpack.c.b16 %v866, %v864
    %v919 = vpack.c.b16 %v869, %v867
    %v920 = vpack.c.b16 %v870, %v868
    %v921 = vpack.c.b16 %v873, %v871
    %v922 = vpack.c.b16 %v874, %v872
    %v923 = vpack.c.b16 %v877, %v875
    %v924 = vpack.c.b16 %v878, %v876
    %v925 = vpack.c.b16 %v881, %v879
    %v926 = vpack.c.b16 %v882, %v880
    %v927 = vpack.c.b16 %v885, %v883
    %v928 = vpack.c.b16 %v886, %v884
    %v929 = vpack.c.b16 %v889, %v887
    %v930 = vpack.c.b16 %v890, %v888
    %v931 = vpack.c.b16 %v893, %v891
    %v932 = vpack.c.b16 %v894, %v892
    %v933 = vpack.c.b16 %v897, %v895
    %v934 = vpack.c.b16 %v898, %v896
    %v935 = vpack.c.b16 %v901, %v899
    %v936 = vpack.c.b16 %v902, %v900
    %v937 = vpack.c.b16 %v905, %v903
    %v938 = vpack.c.b16 %v906, %v904
    %971 = vmatprep.subr.bf16.mxu0 %v908
    %972 = vmatpush1.bf16.msra.mxu0 %v907
    %973 = vmatprep.subr.bf16.mxu0 %v910
    %974 = vmatpush1.bf16.msra.mxu0 %v909
    %975 = vmatprep.subr.bf16.mxu0 %v912
    %976 = vmatpush1.bf16.msra.mxu0 %v911
    %977 = vmatprep.subr.bf16.mxu0 %v914
    %978 = vmatpush1.bf16.msra.mxu0 %v913
    %979 = vmatprep.subr.bf16.mxu0 %v916
    %980 = vmatpush1.bf16.msra.mxu0 %v915
    %981 = vmatprep.subr.bf16.mxu0 %v918
    %982 = vmatpush1.bf16.msra.mxu0 %v917
    %983 = vmatprep.subr.bf16.mxu0 %v920
    %984 = vmatpush1.bf16.msra.mxu0 %v919
    %985 = vmatprep.subr.bf16.mxu0 %v922
    %986 = vmatpush1.bf16.msra.mxu0 %v921
    %987 = vmatprep.subr.bf16.mxu0 %v924
    %988 = vmatpush1.bf16.msra.mxu0 %v923
    %989 = vmatprep.subr.bf16.mxu0 %v926
    %990 = vmatpush1.bf16.msra.mxu0 %v925
    %991 = vmatprep.subr.bf16.mxu0 %v928
    %992 = vmatpush1.bf16.msra.mxu0 %v927
    %993 = vmatprep.subr.bf16.mxu0 %v930
    %994 = vmatpush1.bf16.msra.mxu0 %v929
    %995 = vmatprep.subr.bf16.mxu0 %v932
    %996 = vmatpush1.bf16.msra.mxu0 %v931
    %997 = vmatprep.subr.bf16.mxu0 %v934
    %998 = vmatpush1.bf16.msra.mxu0 %v933
    %999 = vmatprep.subr.bf16.mxu0 %v936
    %1000 = vmatpush1.bf16.msra.mxu0 %v935
    %1001 = vmatprep.subr.bf16.mxu0 %v938
    %1002 = vmatpush1.bf16.msra.mxu0 %v937
    %1003 = vmatprep.mubr.bf16.mxu0 %v764
    %1004 = vmatmul.mubr.bf16.gmra.mrb[0].mxu0 %v763
    %v1005 = vpop.f32.mrb[0].mxu0
    %v1006 = vadd.f32 %v804, %v1005
    %v1007 = vpop.f32.mrb[0].mxu0
    %v1008 = vadd.f32 %v808, %v1007
    %v1009 = vpop.f32.mrb[0].mxu0
    %v1010 = vadd.f32 %v804, %v1009
    %v1011 = vpop.f32.mrb[0].mxu0
    %v1012 = vadd.f32 %v808, %v1011
    %1013 = vdwg.mxu0
    %v1014 = vmax.f32 %v1006, 0.0
    %v1015 = vmax.f32 %v1008, 0.0
    %v1016 = vmax.f32 %v1010, 0.0
    %v1017 = vmax.f32 %v1012, 0.0
    %v1018 = vpack.c.bf16 %v1016, %v1014
    %v1019 = vpack.c.bf16 %v1017, %v1015
    %s1020 = scalar_lea.vmem [#allocation6], 512
    %v1021 = vld [vmem:[%s1020] sm:$0xff]
    %v1022 = vld [vmem:[%s1020 + $0x8] sm:$0xff]
    %v1023 = vld [vmem:[%s1020 + $0x10] sm:$0xff]
    %v1024 = vld [vmem:[%s1020 + $0x18] sm:$0xff]
    %v1025 = vld [vmem:[%s1020 + $0x20] sm:$0xff]
    %v1026 = vld [vmem:[%s1020 + $0x28] sm:$0xff]
    %v1027 = vld [vmem:[%s1020 + $0x30] sm:$0xff]
    %v1028 = vld [vmem:[%s1020 + $0x38] sm:$0xff]
    %v1029 = vld [vmem:[%s1020 + $0x40] sm:$0xff]
    %v1030 = vld [vmem:[%s1020 + $0x48] sm:$0xff]
    %v1031 = vld [vmem:[%s1020 + $0x50] sm:$0xff]
    %v1032 = vld [vmem:[%s1020 + $0x58] sm:$0xff]
    %v1033 = vld [vmem:[%s1020 + $0x60] sm:$0xff]
    %v1034 = vld [vmem:[%s1020 + $0x68] sm:$0xff]
    %v1035 = vld [vmem:[%s1020 + $0x70] sm:$0xff]
    %v1036 = vld [vmem:[%s1020 + $0x78] sm:$0xff]
    %v1037 = vld [vmem:[%s1020 + $0x80] sm:$0xff]
    %v1038 = vld [vmem:[%s1020 + $0x88] sm:$0xff]
    %v1039 = vld [vmem:[%s1020 + $0x90] sm:$0xff]
    %v1040 = vld [vmem:[%s1020 + $0x98] sm:$0xff]
    %v1041 = vld [vmem:[%s1020 + $0xa0] sm:$0xff]
    %v1042 = vld [vmem:[%s1020 + $0xa8] sm:$0xff]
    %v1043 = vld [vmem:[%s1020 + $0xb0] sm:$0xff]
    %v1044 = vld [vmem:[%s1020 + $0xb8] sm:$0xff]
    %v1045 = vld [vmem:[%s1020 + $0xc0] sm:$0xff]
    %v1046 = vld [vmem:[%s1020 + $0xc8] sm:$0xff]
    %v1047 = vld [vmem:[%s1020 + $0xd0] sm:$0xff]
    %v1048 = vld [vmem:[%s1020 + $0xd8] sm:$0xff]
    %v1049 = vld [vmem:[%s1020 + $0xe0] sm:$0xff]
    %v1050 = vld [vmem:[%s1020 + $0xe8] sm:$0xff]
    %v1051 = vld [vmem:[%s1020 + $0xf0] sm:$0xff]
    %v1052 = vld [vmem:[%s1020 + $0xf8] sm:$0xff]
    %s1053 = scalar_lea.vmem %s5, 5
    %v1054 = vld [vmem:[%s1053] ss:$8 sm:$0x3]
    %v1056 = vlaneseq
    %v1057 = vshrl.u32 %v1056, 7
    %v1058 = vsub.s32 0, %v1057
    %v1059 = vrot.slane %v1054, %v1058
    %v1060 = vlaneseq
    %v1061 = vshrl.u32 %v1060, 7
    %v1062 = vsub.s32 1, %v1061
    %v1063 = vrot.slane %v1054, %v1062
    %v1098 = vunpack.c.l.b16 %v1021
    %v1099 = vunpack.c.h.b16 %v1021
    %v1100 = vunpack.c.l.b16 %v1022
    %v1101 = vunpack.c.h.b16 %v1022
    %v1102 = vunpack.c.l.b16 %v1023
    %v1103 = vunpack.c.h.b16 %v1023
    %v1104 = vunpack.c.l.b16 %v1024
    %v1105 = vunpack.c.h.b16 %v1024
    %v1106 = vunpack.c.l.b16 %v1025
    %v1107 = vunpack.c.h.b16 %v1025
    %v1108 = vunpack.c.l.b16 %v1026
    %v1109 = vunpack.c.h.b16 %v1026
    %v1110 = vunpack.c.l.b16 %v1027
    %v1111 = vunpack.c.h.b16 %v1027
    %v1112 = vunpack.c.l.b16 %v1028
    %v1113 = vunpack.c.h.b16 %v1028
    %v1114 = vunpack.c.l.b16 %v1029
    %v1115 = vunpack.c.h.b16 %v1029
    %v1116 = vunpack.c.l.b16 %v1030
    %v1117 = vunpack.c.h.b16 %v1030
    %v1118 = vunpack.c.l.b16 %v1031
    %v1119 = vunpack.c.h.b16 %v1031
    %v1120 = vunpack.c.l.b16 %v1032
    %v1121 = vunpack.c.h.b16 %v1032
    %v1122 = vunpack.c.l.b16 %v1033
    %v1123 = vunpack.c.h.b16 %v1033
    %v1124 = vunpack.c.l.b16 %v1034
    %v1125 = vunpack.c.h.b16 %v1034
    %v1126 = vunpack.c.l.b16 %v1035
    %v1127 = vunpack.c.h.b16 %v1035
    %v1128 = vunpack.c.l.b16 %v1036
    %v1129 = vunpack.c.h.b16 %v1036
    %v1130 = vunpack.c.l.b16 %v1037
    %v1131 = vunpack.c.h.b16 %v1037
    %v1132 = vunpack.c.l.b16 %v1038
    %v1133 = vunpack.c.h.b16 %v1038
    %v1134 = vunpack.c.l.b16 %v1039
    %v1135 = vunpack.c.h.b16 %v1039
    %v1136 = vunpack.c.l.b16 %v1040
    %v1137 = vunpack.c.h.b16 %v1040
    %v1138 = vunpack.c.l.b16 %v1041
    %v1139 = vunpack.c.h.b16 %v1041
    %v1140 = vunpack.c.l.b16 %v1042
    %v1141 = vunpack.c.h.b16 %v1042
    %v1142 = vunpack.c.l.b16 %v1043
    %v1143 = vunpack.c.h.b16 %v1043
    %v1144 = vunpack.c.l.b16 %v1044
    %v1145 = vunpack.c.h.b16 %v1044
    %v1146 = vunpack.c.l.b16 %v1045
    %v1147 = vunpack.c.h.b16 %v1045
    %v1148 = vunpack.c.l.b16 %v1046
    %v1149 = vunpack.c.h.b16 %v1046
    %v1150 = vunpack.c.l.b16 %v1047
    %v1151 = vunpack.c.h.b16 %v1047
    %v1152 = vunpack.c.l.b16 %v1048
    %v1153 = vunpack.c.h.b16 %v1048
    %v1154 = vunpack.c.l.b16 %v1049
    %v1155 = vunpack.c.h.b16 %v1049
    %v1156 = vunpack.c.l.b16 %v1050
    %v1157 = vunpack.c.h.b16 %v1050
    %v1158 = vunpack.c.l.b16 %v1051
    %v1159 = vunpack.c.h.b16 %v1051
    %v1160 = vunpack.c.l.b16 %v1052
    %v1161 = vunpack.c.h.b16 %v1052
    %v1162 = vpack.c.b16 %v1100, %v1098
    %v1163 = vpack.c.b16 %v1101, %v1099
    %v1164 = vpack.c.b16 %v1104, %v1102
    %v1165 = vpack.c.b16 %v1105, %v1103
    %v1166 = vpack.c.b16 %v1108, %v1106
    %v1167 = vpack.c.b16 %v1109, %v1107
    %v1168 = vpack.c.b16 %v1112, %v1110
    %v1169 = vpack.c.b16 %v1113, %v1111
    %v1170 = vpack.c.b16 %v1116, %v1114
    %v1171 = vpack.c.b16 %v1117, %v1115
    %v1172 = vpack.c.b16 %v1120, %v1118
    %v1173 = vpack.c.b16 %v1121, %v1119
    %v1174 = vpack.c.b16 %v1124, %v1122
    %v1175 = vpack.c.b16 %v1125, %v1123
    %v1176 = vpack.c.b16 %v1128, %v1126
    %v1177 = vpack.c.b16 %v1129, %v1127
    %v1178 = vpack.c.b16 %v1132, %v1130
    %v1179 = vpack.c.b16 %v1133, %v1131
    %v1180 = vpack.c.b16 %v1136, %v1134
    %v1181 = vpack.c.b16 %v1137, %v1135
    %v1182 = vpack.c.b16 %v1140, %v1138
    %v1183 = vpack.c.b16 %v1141, %v1139
    %v1184 = vpack.c.b16 %v1144, %v1142
    %v1185 = vpack.c.b16 %v1145, %v1143
    %v1186 = vpack.c.b16 %v1148, %v1146
    %v1187 = vpack.c.b16 %v1149, %v1147
    %v1188 = vpack.c.b16 %v1152, %v1150
    %v1189 = vpack.c.b16 %v1153, %v1151
    %v1190 = vpack.c.b16 %v1156, %v1154
    %v1191 = vpack.c.b16 %v1157, %v1155
    %v1192 = vpack.c.b16 %v1160, %v1158
    %v1193 = vpack.c.b16 %v1161, %v1159
    %1226 = vmatprep.subr.bf16.mxu0 %v1163
    %1227 = vmatpush1.bf16.msra.mxu0 %v1162
    %1228 = vmatprep.subr.bf16.mxu0 %v1165
    %1229 = vmatpush1.bf16.msra.mxu0 %v1164
    %1230 = vmatprep.subr.bf16.mxu0 %v1167
    %1231 = vmatpush1.bf16.msra.mxu0 %v1166
    %1232 = vmatprep.subr.bf16.mxu0 %v1169
    %1233 = vmatpush1.bf16.msra.mxu0 %v1168
    %1234 = vmatprep.subr.bf16.mxu0 %v1171
    %1235 = vmatpush1.bf16.msra.mxu0 %v1170
    %1236 = vmatprep.subr.bf16.mxu0 %v1173
    %1237 = vmatpush1.bf16.msra.mxu0 %v1172
    %1238 = vmatprep.subr.bf16.mxu0 %v1175
    %1239 = vmatpush1.bf16.msra.mxu0 %v1174
    %1240 = vmatprep.subr.bf16.mxu0 %v1177
    %1241 = vmatpush1.bf16.msra.mxu0 %v1176
    %1242 = vmatprep.subr.bf16.mxu0 %v1179
    %1243 = vmatpush1.bf16.msra.mxu0 %v1178
    %1244 = vmatprep.subr.bf16.mxu0 %v1181
    %1245 = vmatpush1.bf16.msra.mxu0 %v1180
    %1246 = vmatprep.subr.bf16.mxu0 %v1183
    %1247 = vmatpush1.bf16.msra.mxu0 %v1182
    %1248 = vmatprep.subr.bf16.mxu0 %v1185
    %1249 = vmatpush1.bf16.msra.mxu0 %v1184
    %1250 = vmatprep.subr.bf16.mxu0 %v1187
    %1251 = vmatpush1.bf16.msra.mxu0 %v1186
    %1252 = vmatprep.subr.bf16.mxu0 %v1189
    %1253 = vmatpush1.bf16.msra.mxu0 %v1188
    %1254 = vmatprep.subr.bf16.mxu0 %v1191
    %1255 = vmatpush1.bf16.msra.mxu0 %v1190
    %1256 = vmatprep.subr.bf16.mxu0 %v1193
    %1257 = vmatpush1.bf16.msra.mxu0 %v1192
    %1258 = vmatprep.mubr.bf16.mxu0 %v1019
    %1259 = vmatmul.mubr.bf16.gmra.mrb[0].mxu0 %v1018
    %v1260 = vpop.f32.mrb[0].mxu0
    %v1261 = vadd.f32 %v1059, %v1260
    %v1262 = vpop.f32.mrb[0].mxu0
    %v1263 = vadd.f32 %v1063, %v1262
    %v1264 = vpop.f32.mrb[0].mxu0
    %v1265 = vadd.f32 %v1059, %v1264
    %v1266 = vpop.f32.mrb[0].mxu0
    %v1267 = vadd.f32 %v1063, %v1266
    %1268 = vdwg.mxu0
    %v1269 = vadd.f32 %v1261, %v759
    %v1270 = vadd.f32 %v1263, %v760
    %v1271 = vadd.f32 %v1265, %v761
    %v1272 = vadd.f32 %v1267, %v762
    %v1273 = vmax.f32 %v1269, 0.0
    %v1274 = vmax.f32 %v1270, 0.0
    %v1275 = vmax.f32 %v1271, 0.0
    %v1276 = vmax.f32 %v1272, 0.0
    %v1277 = vpack.c.bf16 %v1275, %v1273
    %v1278 = vpack.c.bf16 %v1276, %v1274
    %v1279 = vld [vmem:[#allocation7] sm:$0xf]
    %v1280 = vld [vmem:[#allocation7 + $0x4] sm:$0xf]
    %v1281 = vld [vmem:[#allocation7 + $0x8] sm:$0xf]
    %v1282 = vld [vmem:[#allocation7 + $0xc] sm:$0xf]
    %v1283 = vld [vmem:[#allocation7 + $0x10] sm:$0xf]
    %v1284 = vld [vmem:[#allocation7 + $0x14] sm:$0xf]
    %v1285 = vld [vmem:[#allocation7 + $0x18] sm:$0xf]
    %v1286 = vld [vmem:[#allocation7 + $0x1c] sm:$0xf]
    %v1287 = vld [vmem:[#allocation7 + $0x20] sm:$0xf]
    %v1288 = vld [vmem:[#allocation7 + $0x24] sm:$0xf]
    %v1289 = vld [vmem:[#allocation7 + $0x28] sm:$0xf]
    %v1290 = vld [vmem:[#allocation7 + $0x2c] sm:$0xf]
    %v1291 = vld [vmem:[#allocation7 + $0x30] sm:$0xf]
    %v1292 = vld [vmem:[#allocation7 + $0x34] sm:$0xf]
    %v1293 = vld [vmem:[#allocation7 + $0x38] sm:$0xf]
    %v1294 = vld [vmem:[#allocation7 + $0x3c] sm:$0xf]
    %v1295 = vld [vmem:[#allocation7 + $0x40] sm:$0xf]
    %v1296 = vld [vmem:[#allocation7 + $0x44] sm:$0xf]
    %v1297 = vld [vmem:[#allocation7 + $0x48] sm:$0xf]
    %v1298 = vld [vmem:[#allocation7 + $0x4c] sm:$0xf]
    %v1299 = vld [vmem:[#allocation7 + $0x50] sm:$0xf]
    %v1300 = vld [vmem:[#allocation7 + $0x54] sm:$0xf]
    %v1301 = vld [vmem:[#allocation7 + $0x58] sm:$0xf]
    %v1302 = vld [vmem:[#allocation7 + $0x5c] sm:$0xf]
    %v1303 = vld [vmem:[#allocation7 + $0x60] sm:$0xf]
    %v1304 = vld [vmem:[#allocation7 + $0x64] sm:$0xf]
    %v1305 = vld [vmem:[#allocation7 + $0x68] sm:$0xf]
    %v1306 = vld [vmem:[#allocation7 + $0x6c] sm:$0xf]
    %v1307 = vld [vmem:[#allocation7 + $0x70] sm:$0xf]
    %v1308 = vld [vmem:[#allocation7 + $0x74] sm:$0xf]
    %v1309 = vld [vmem:[#allocation7 + $0x78] sm:$0xf]
    %v1310 = vld [vmem:[#allocation7 + $0x7c] sm:$0xf]
    %v1311 = vld [vmem:[%s5 + $0x6] ss:$0 sm:$0xff]
    %v1344 = vunpack.c.l.b16 %v1279
    %v1345 = vunpack.c.l.b16 %v1280
    %v1346 = vunpack.c.l.b16 %v1281
    %v1347 = vunpack.c.l.b16 %v1282
    %v1348 = vunpack.c.l.b16 %v1283
    %v1349 = vunpack.c.l.b16 %v1284
    %v1350 = vunpack.c.l.b16 %v1285
    %v1351 = vunpack.c.l.b16 %v1286
    %v1352 = vunpack.c.l.b16 %v1287
    %v1353 = vunpack.c.l.b16 %v1288
    %v1354 = vunpack.c.l.b16 %v1289
    %v1355 = vunpack.c.l.b16 %v1290
    %v1356 = vunpack.c.l.b16 %v1291
    %v1357 = vunpack.c.l.b16 %v1292
    %v1358 = vunpack.c.l.b16 %v1293
    %v1359 = vunpack.c.l.b16 %v1294
    %v1360 = vunpack.c.l.b16 %v1295
    %v1361 = vunpack.c.l.b16 %v1296
    %v1362 = vunpack.c.l.b16 %v1297
    %v1363 = vunpack.c.l.b16 %v1298
    %v1364 = vunpack.c.l.b16 %v1299
    %v1365 = vunpack.c.l.b16 %v1300
    %v1366 = vunpack.c.l.b16 %v1301
    %v1367 = vunpack.c.l.b16 %v1302
    %v1368 = vunpack.c.l.b16 %v1303
    %v1369 = vunpack.c.l.b16 %v1304
    %v1370 = vunpack.c.l.b16 %v1305
    %v1371 = vunpack.c.l.b16 %v1306
    %v1372 = vunpack.c.l.b16 %v1307
    %v1373 = vunpack.c.l.b16 %v1308
    %v1374 = vunpack.c.l.b16 %v1309
    %v1375 = vunpack.c.l.b16 %v1310
    %v1376 = vpack.c.b16 %v1345, %v1344
    %v1377 = vpack.c.b16 %v1347, %v1346
    %v1378 = vpack.c.b16 %v1349, %v1348
    %v1379 = vpack.c.b16 %v1351, %v1350
    %v1380 = vpack.c.b16 %v1353, %v1352
    %v1381 = vpack.c.b16 %v1355, %v1354
    %v1382 = vpack.c.b16 %v1357, %v1356
    %v1383 = vpack.c.b16 %v1359, %v1358
    %v1384 = vpack.c.b16 %v1361, %v1360
    %v1385 = vpack.c.b16 %v1363, %v1362
    %v1386 = vpack.c.b16 %v1365, %v1364
    %v1387 = vpack.c.b16 %v1367, %v1366
    %v1388 = vpack.c.b16 %v1369, %v1368
    %v1389 = vpack.c.b16 %v1371, %v1370
    %v1390 = vpack.c.b16 %v1373, %v1372
    %v1391 = vpack.c.b16 %v1375, %v1374
    %1408 = vmatprep.subr.bf16.mxu0 0
    %1409 = vmatpush1.bf16.msra.mxu0 %v1376
    %1410 = vmatprep.subr.bf16.mxu0 0
    %1411 = vmatpush1.bf16.msra.mxu0 %v1377
    %1412 = vmatprep.subr.bf16.mxu0 0
    %1413 = vmatpush1.bf16.msra.mxu0 %v1378
    %1414 = vmatprep.subr.bf16.mxu0 0
    %1415 = vmatpush1.bf16.msra.mxu0 %v1379
    %1416 = vmatprep.subr.bf16.mxu0 0
    %1417 = vmatpush1.bf16.msra.mxu0 %v1380
    %1418 = vmatprep.subr.bf16.mxu0 0
    %1419 = vmatpush1.bf16.msra.mxu0 %v1381
    %1420 = vmatprep.subr.bf16.mxu0 0
    %1421 = vmatpush1.bf16.msra.mxu0 %v1382
    %1422 = vmatprep.subr.bf16.mxu0 0
    %1423 = vmatpush1.bf16.msra.mxu0 %v1383
    %1424 = vmatprep.subr.bf16.mxu0 0
    %1425 = vmatpush1.bf16.msra.mxu0 %v1384
    %1426 = vmatprep.subr.bf16.mxu0 0
    %1427 = vmatpush1.bf16.msra.mxu0 %v1385
    %1428 = vmatprep.subr.bf16.mxu0 0
    %1429 = vmatpush1.bf16.msra.mxu0 %v1386
    %1430 = vmatprep.subr.bf16.mxu0 0
    %1431 = vmatpush1.bf16.msra.mxu0 %v1387
    %1432 = vmatprep.subr.bf16.mxu0 0
    %1433 = vmatpush1.bf16.msra.mxu0 %v1388
    %1434 = vmatprep.subr.bf16.mxu0 0
    %1435 = vmatpush1.bf16.msra.mxu0 %v1389
    %1436 = vmatprep.subr.bf16.mxu0 0
    %1437 = vmatpush1.bf16.msra.mxu0 %v1390
    %1438 = vmatprep.subr.bf16.mxu0 0
    %1439 = vmatpush1.bf16.msra.mxu0 %v1391
    %1440 = vmatprep.mubr.bf16.mxu0 %v1278
    %1441 = vmatmul.mubr.bf16.gmra.mrb[0].mxu0 %v1277
    %v1442 = vpop.f32.mrb[0].mxu0
    %v1443 = vadd.f32 %v1311, %v1442
    %v1444 = vpop.f32.mrb[0].mxu0
    %v1445 = vpop.f32.mrb[0].mxu0
    %v1446 = vadd.f32 %v1311, %v1445
    %v1447 = vpop.f32.mrb[0].mxu0
    %1448 = vdwg.mxu0
    %v1449 = vmax.f32 %v1443, 0.0
    %v1450 = vmax.f32 %v1446, 0.0
    %v1451 = vpack.c.bf16 %v1450, %v1449
    %s1452 = scalar_lea.vmem [#allocation2], 64
    %v1453 = vld [vmem:[%s1452] sm:$0xf]
    %v1454 = vld [vmem:[%s1452 + $0x4] sm:$0xf]
    %v1455 = vld [vmem:[%s1452 + $0x8] sm:$0xf]
    %v1456 = vld [vmem:[%s1452 + $0xc] sm:$0xf]
    %v1457 = vld [vmem:[%s1452 + $0x10] sm:$0xf]
    %v1458 = vld [vmem:[%s1452 + $0x14] sm:$0xf]
    %v1459 = vld [vmem:[%s1452 + $0x18] sm:$0xf]
    %v1460 = vld [vmem:[%s1452 + $0x1c] sm:$0xf]
    %v1461 = vld [vmem:[%s1452 + $0x20] sm:$0xf]
    %v1462 = vld [vmem:[%s1452 + $0x24] sm:$0xf]
    %v1463 = vld [vmem:[%s1452 + $0x28] sm:$0xf]
    %v1464 = vld [vmem:[%s1452 + $0x2c] sm:$0xf]
    %v1465 = vld [vmem:[%s1452 + $0x30] sm:$0xf]
    %v1466 = vld [vmem:[%s1452 + $0x34] sm:$0xf]
    %v1467 = vld [vmem:[%s1452 + $0x38] sm:$0xf]
    %v1468 = vld [vmem:[%s1452 + $0x3c] sm:$0xf]
    %v1469 = vld [vmem:[%s5 + $0x7] ss:$0 sm:$0xff]
    %v1486 = vunpack.c.l.b16 %v1453
    %v1487 = vunpack.c.l.b16 %v1454
    %v1488 = vunpack.c.l.b16 %v1455
    %v1489 = vunpack.c.l.b16 %v1456
    %v1490 = vunpack.c.l.b16 %v1457
    %v1491 = vunpack.c.l.b16 %v1458
    %v1492 = vunpack.c.l.b16 %v1459
    %v1493 = vunpack.c.l.b16 %v1460
    %v1494 = vunpack.c.l.b16 %v1461
    %v1495 = vunpack.c.l.b16 %v1462
    %v1496 = vunpack.c.l.b16 %v1463
    %v1497 = vunpack.c.l.b16 %v1464
    %v1498 = vunpack.c.l.b16 %v1465
    %v1499 = vunpack.c.l.b16 %v1466
    %v1500 = vunpack.c.l.b16 %v1467
    %v1501 = vunpack.c.l.b16 %v1468
    %v1502 = vpack.c.b16 %v1487, %v1486
    %v1503 = vpack.c.b16 %v1489, %v1488
    %v1504 = vpack.c.b16 %v1491, %v1490
    %v1505 = vpack.c.b16 %v1493, %v1492
    %v1506 = vpack.c.b16 %v1495, %v1494
    %v1507 = vpack.c.b16 %v1497, %v1496
    %v1508 = vpack.c.b16 %v1499, %v1498
    %v1509 = vpack.c.b16 %v1501, %v1500
    %1518 = vmatprep.subr.bf16.mxu0 0
    %1519 = vmatpush1.bf16.msra.mxu0 %v1502
    %1520 = vmatprep.subr.bf16.mxu0 0
    %1521 = vmatpush1.bf16.msra.mxu0 %v1503
    %1522 = vmatprep.subr.bf16.mxu0 0
    %1523 = vmatpush1.bf16.msra.mxu0 %v1504
    %1524 = vmatprep.subr.bf16.mxu0 0
    %1525 = vmatpush1.bf16.msra.mxu0 %v1505
    %1526 = vmatprep.subr.bf16.mxu0 0
    %1527 = vmatpush1.bf16.msra.mxu0 %v1506
    %1528 = vmatprep.subr.bf16.mxu0 0
    %1529 = vmatpush1.bf16.msra.mxu0 %v1507
    %1530 = vmatprep.subr.bf16.mxu0 0
    %1531 = vmatpush1.bf16.msra.mxu0 %v1508
    %1532 = vmatprep.subr.bf16.mxu0 0
    %1533 = vmatpush1.bf16.msra.mxu0 %v1509
    %1534 = vmatprep.subr.bf16.mxu0 0
    %1535 = vmatpush1.bf16.msra.mxu0 0
    %1536 = vmatprep.subr.bf16.mxu0 0
    %1537 = vmatpush1.bf16.msra.mxu0 0
    %1538 = vmatprep.subr.bf16.mxu0 0
    %1539 = vmatpush1.bf16.msra.mxu0 0
    %1540 = vmatprep.subr.bf16.mxu0 0
    %1541 = vmatpush1.bf16.msra.mxu0 0
    %1542 = vmatprep.subr.bf16.mxu0 0
    %1543 = vmatpush1.bf16.msra.mxu0 0
    %1544 = vmatprep.subr.bf16.mxu0 0
    %1545 = vmatpush1.bf16.msra.mxu0 0
    %1546 = vmatprep.subr.bf16.mxu0 0
    %1547 = vmatpush1.bf16.msra.mxu0 0
    %1548 = vmatprep.subr.bf16.mxu0 0
    %1549 = vmatpush1.bf16.msra.mxu0 0
    %1550 = vmatprep.mubr.bf16.mxu0 0
    %1551 = vmatmul.mubr.bf16.gmra.mrb[0].mxu0 %v1451
    %v1552 = vpop.f32.mrb[0].mxu0
    %v1553 = vadd.f32 %v1469, %v1552
    %v1554 = vpop.f32.mrb[0].mxu0
    %v1555 = vpop.f32.mrb[0].mxu0
    %v1556 = vadd.f32 %v1469, %v1555
    %v1557 = vpop.f32.mrb[0].mxu0
    %1558 = vdwg.mxu0
    %s1559 = scalar_lea.vmem [#allocation7], 128
    %v1560 = vld [vmem:[%s1559] sm:$0xf]
    %v1561 = vld [vmem:[%s1559 + $0x4] sm:$0xf]
    %v1562 = vld [vmem:[%s1559 + $0x8] sm:$0xf]
    %v1563 = vld [vmem:[%s1559 + $0xc] sm:$0xf]
    %v1564 = vld [vmem:[%s1559 + $0x10] sm:$0xf]
    %v1565 = vld [vmem:[%s1559 + $0x14] sm:$0xf]
    %v1566 = vld [vmem:[%s1559 + $0x18] sm:$0xf]
    %v1567 = vld [vmem:[%s1559 + $0x1c] sm:$0xf]
    %v1568 = vld [vmem:[%s1559 + $0x20] sm:$0xf]
    %v1569 = vld [vmem:[%s1559 + $0x24] sm:$0xf]
    %v1570 = vld [vmem:[%s1559 + $0x28] sm:$0xf]
    %v1571 = vld [vmem:[%s1559 + $0x2c] sm:$0xf]
    %v1572 = vld [vmem:[%s1559 + $0x30] sm:$0xf]
    %v1573 = vld [vmem:[%s1559 + $0x34] sm:$0xf]
    %v1574 = vld [vmem:[%s1559 + $0x38] sm:$0xf]
    %v1575 = vld [vmem:[%s1559 + $0x3c] sm:$0xf]
    %v1576 = vld [vmem:[%s1559 + $0x40] sm:$0xf]
    %v1577 = vld [vmem:[%s1559 + $0x44] sm:$0xf]
    %v1578 = vld [vmem:[%s1559 + $0x48] sm:$0xf]
    %v1579 = vld [vmem:[%s1559 + $0x4c] sm:$0xf]
    %v1580 = vld [vmem:[%s1559 + $0x50] sm:$0xf]
    %v1581 = vld [vmem:[%s1559 + $0x54] sm:$0xf]
    %v1582 = vld [vmem:[%s1559 + $0x58] sm:$0xf]
    %v1583 = vld [vmem:[%s1559 + $0x5c] sm:$0xf]
    %v1584 = vld [vmem:[%s1559 + $0x60] sm:$0xf]
    %v1585 = vld [vmem:[%s1559 + $0x64] sm:$0xf]
    %v1586 = vld [vmem:[%s1559 + $0x68] sm:$0xf]
    %v1587 = vld [vmem:[%s1559 + $0x6c] sm:$0xf]
    %v1588 = vld [vmem:[%s1559 + $0x70] sm:$0xf]
    %v1589 = vld [vmem:[%s1559 + $0x74] sm:$0xf]
    %v1590 = vld [vmem:[%s1559 + $0x78] sm:$0xf]
    %v1591 = vld [vmem:[%s1559 + $0x7c] sm:$0xf]
    %v1592 = vld [vmem:[%s5 + $0x10] ss:$0 sm:$0xff]
    %v1625 = vunpack.c.l.b16 %v1560
    %v1626 = vunpack.c.l.b16 %v1561
    %v1627 = vunpack.c.l.b16 %v1562
    %v1628 = vunpack.c.l.b16 %v1563
    %v1629 = vunpack.c.l.b16 %v1564
    %v1630 = vunpack.c.l.b16 %v1565
    %v1631 = vunpack.c.l.b16 %v1566
    %v1632 = vunpack.c.l.b16 %v1567
    %v1633 = vunpack.c.l.b16 %v1568
    %v1634 = vunpack.c.l.b16 %v1569
    %v1635 = vunpack.c.l.b16 %v1570
    %v1636 = vunpack.c.l.b16 %v1571
    %v1637 = vunpack.c.l.b16 %v1572
    %v1638 = vunpack.c.l.b16 %v1573
    %v1639 = vunpack.c.l.b16 %v1574
    %v1640 = vunpack.c.l.b16 %v1575
    %v1641 = vunpack.c.l.b16 %v1576
    %v1642 = vunpack.c.l.b16 %v1577
    %v1643 = vunpack.c.l.b16 %v1578
    %v1644 = vunpack.c.l.b16 %v1579
    %v1645 = vunpack.c.l.b16 %v1580
    %v1646 = vunpack.c.l.b16 %v1581
    %v1647 = vunpack.c.l.b16 %v1582
    %v1648 = vunpack.c.l.b16 %v1583
    %v1649 = vunpack.c.l.b16 %v1584
    %v1650 = vunpack.c.l.b16 %v1585
    %v1651 = vunpack.c.l.b16 %v1586
    %v1652 = vunpack.c.l.b16 %v1587
    %v1653 = vunpack.c.l.b16 %v1588
    %v1654 = vunpack.c.l.b16 %v1589
    %v1655 = vunpack.c.l.b16 %v1590
    %v1656 = vunpack.c.l.b16 %v1591
    %v1657 = vpack.c.b16 %v1626, %v1625
    %v1658 = vpack.c.b16 %v1628, %v1627
    %v1659 = vpack.c.b16 %v1630, %v1629
    %v1660 = vpack.c.b16 %v1632, %v1631
    %v1661 = vpack.c.b16 %v1634, %v1633
    %v1662 = vpack.c.b16 %v1636, %v1635
    %v1663 = vpack.c.b16 %v1638, %v1637
    %v1664 = vpack.c.b16 %v1640, %v1639
    %v1665 = vpack.c.b16 %v1642, %v1641
    %v1666 = vpack.c.b16 %v1644, %v1643
    %v1667 = vpack.c.b16 %v1646, %v1645
    %v1668 = vpack.c.b16 %v1648, %v1647
    %v1669 = vpack.c.b16 %v1650, %v1649
    %v1670 = vpack.c.b16 %v1652, %v1651
    %v1671 = vpack.c.b16 %v1654, %v1653
    %v1672 = vpack.c.b16 %v1656, %v1655
    %1689 = vmatprep.subr.bf16.mxu0 0
    %1690 = vmatpush1.bf16.msra.mxu0 %v1657
    %1691 = vmatprep.subr.bf16.mxu0 0
    %1692 = vmatpush1.bf16.msra.mxu0 %v1658
    %1693 = vmatprep.subr.bf16.mxu0 0
    %1694 = vmatpush1.bf16.msra.mxu0 %v1659
    %1695 = vmatprep.subr.bf16.mxu0 0
    %1696 = vmatpush1.bf16.msra.mxu0 %v1660
    %1697 = vmatprep.subr.bf16.mxu0 0
    %1698 = vmatpush1.bf16.msra.mxu0 %v1661
    %1699 = vmatprep.subr.bf16.mxu0 0
    %1700 = vmatpush1.bf16.msra.mxu0 %v1662
    %1701 = vmatprep.subr.bf16.mxu0 0
    %1702 = vmatpush1.bf16.msra.mxu0 %v1663
    %1703 = vmatprep.subr.bf16.mxu0 0
    %1704 = vmatpush1.bf16.msra.mxu0 %v1664
    %1705 = vmatprep.subr.bf16.mxu0 0
    %1706 = vmatpush1.bf16.msra.mxu0 %v1665
    %1707 = vmatprep.subr.bf16.mxu0 0
    %1708 = vmatpush1.bf16.msra.mxu0 %v1666
    %1709 = vmatprep.subr.bf16.mxu0 0
    %1710 = vmatpush1.bf16.msra.mxu0 %v1667
    %1711 = vmatprep.subr.bf16.mxu0 0
    %1712 = vmatpush1.bf16.msra.mxu0 %v1668
    %1713 = vmatprep.subr.bf16.mxu0 0
    %1714 = vmatpush1.bf16.msra.mxu0 %v1669
    %1715 = vmatprep.subr.bf16.mxu0 0
    %1716 = vmatpush1.bf16.msra.mxu0 %v1670
    %1717 = vmatprep.subr.bf16.mxu0 0
    %1718 = vmatpush1.bf16.msra.mxu0 %v1671
    %1719 = vmatprep.subr.bf16.mxu0 0
    %1720 = vmatpush1.bf16.msra.mxu0 %v1672
    %1721 = vmatprep.mubr.bf16.mxu0 %v1278
    %1722 = vmatmul.mubr.bf16.gmra.mrb[0].mxu0 %v1277
    %v1723 = vpop.f32.mrb[0].mxu0
    %v1724 = vadd.f32 %v1592, %v1723
    %v1725 = vpop.f32.mrb[0].mxu0
    %v1726 = vpop.f32.mrb[0].mxu0
    %v1727 = vadd.f32 %v1592, %v1726
    %v1728 = vpop.f32.mrb[0].mxu0
    %1729 = vdwg.mxu0
    %v1730 = vadd.f32 %v1553, %v1724
    %v1731 = vadd.f32 %v1556, %v1727
    %v1732 = vmax.f32 %v1730, 0.0
    %v1733 = vmax.f32 %v1731, 0.0
    %v1734 = vpack.c.bf16 %v1733, %v1732
    %s1735 = scalar_lea.vmem [#allocation2], 128
    %v1736 = vld [vmem:[%s1735] sm:$0xf]
    %v1737 = vld [vmem:[%s1735 + $0x4] sm:$0xf]
    %v1738 = vld [vmem:[%s1735 + $0x8] sm:$0xf]
    %v1739 = vld [vmem:[%s1735 + $0xc] sm:$0xf]
    %v1740 = vld [vmem:[%s1735 + $0x10] sm:$0xf]
    %v1741 = vld [vmem:[%s1735 + $0x14] sm:$0xf]
    %v1742 = vld [vmem:[%s1735 + $0x18] sm:$0xf]
    %v1743 = vld [vmem:[%s1735 + $0x1c] sm:$0xf]
    %v1744 = vld [vmem:[%s1735 + $0x20] sm:$0xf]
    %v1745 = vld [vmem:[%s1735 + $0x24] sm:$0xf]
    %v1746 = vld [vmem:[%s1735 + $0x28] sm:$0xf]
    %v1747 = vld [vmem:[%s1735 + $0x2c] sm:$0xf]
    %v1748 = vld [vmem:[%s1735 + $0x30] sm:$0xf]
    %v1749 = vld [vmem:[%s1735 + $0x34] sm:$0xf]
    %v1750 = vld [vmem:[%s1735 + $0x38] sm:$0xf]
    %v1751 = vld [vmem:[%s1735 + $0x3c] sm:$0xf]
    %v1752 = vld [vmem:[%s5 + $0x11] ss:$0 sm:$0xff]
    %v1769 = vunpack.c.l.b16 %v1736
    %v1770 = vunpack.c.l.b16 %v1737
    %v1771 = vunpack.c.l.b16 %v1738
    %v1772 = vunpack.c.l.b16 %v1739
    %v1773 = vunpack.c.l.b16 %v1740
    %v1774 = vunpack.c.l.b16 %v1741
    %v1775 = vunpack.c.l.b16 %v1742
    %v1776 = vunpack.c.l.b16 %v1743
    %v1777 = vunpack.c.l.b16 %v1744
    %v1778 = vunpack.c.l.b16 %v1745
    %v1779 = vunpack.c.l.b16 %v1746
    %v1780 = vunpack.c.l.b16 %v1747
    %v1781 = vunpack.c.l.b16 %v1748
    %v1782 = vunpack.c.l.b16 %v1749
    %v1783 = vunpack.c.l.b16 %v1750
    %v1784 = vunpack.c.l.b16 %v1751
    %v1785 = vpack.c.b16 %v1770, %v1769
    %v1786 = vpack.c.b16 %v1772, %v1771
    %v1787 = vpack.c.b16 %v1774, %v1773
    %v1788 = vpack.c.b16 %v1776, %v1775
    %v1789 = vpack.c.b16 %v1778, %v1777
    %v1790 = vpack.c.b16 %v1780, %v1779
    %v1791 = vpack.c.b16 %v1782, %v1781
    %v1792 = vpack.c.b16 %v1784, %v1783
    %1801 = vmatprep.subr.bf16.mxu0 0
    %1802 = vmatpush1.bf16.msra.mxu0 %v1785
    %1803 = vmatprep.subr.bf16.mxu0 0
    %1804 = vmatpush1.bf16.msra.mxu0 %v1786
    %1805 = vmatprep.subr.bf16.mxu0 0
    %1806 = vmatpush1.bf16.msra.mxu0 %v1787
    %1807 = vmatprep.subr.bf16.mxu0 0
    %1808 = vmatpush1.bf16.msra.mxu0 %v1788
    %1809 = vmatprep.subr.bf16.mxu0 0
    %1810 = vmatpush1.bf16.msra.mxu0 %v1789
    %1811 = vmatprep.subr.bf16.mxu0 0
    %1812 = vmatpush1.bf16.msra.mxu0 %v1790
    %1813 = vmatprep.subr.bf16.mxu0 0
    %1814 = vmatpush1.bf16.msra.mxu0 %v1791
    %1815 = vmatprep.subr.bf16.mxu0 0
    %1816 = vmatpush1.bf16.msra.mxu0 %v1792
    %1817 = vmatprep.subr.bf16.mxu0 0
    %1818 = vmatpush1.bf16.msra.mxu0 0
    %1819 = vmatprep.subr.bf16.mxu0 0
    %1820 = vmatpush1.bf16.msra.mxu0 0
    %1821 = vmatprep.subr.bf16.mxu0 0
    %1822 = vmatpush1.bf16.msra.mxu0 0
    %1823 = vmatprep.subr.bf16.mxu0 0
    %1824 = vmatpush1.bf16.msra.mxu0 0
    %1825 = vmatprep.subr.bf16.mxu0 0
    %1826 = vmatpush1.bf16.msra.mxu0 0
    %1827 = vmatprep.subr.bf16.mxu0 0
    %1828 = vmatpush1.bf16.msra.mxu0 0
    %1829 = vmatprep.subr.bf16.mxu0 0
    %1830 = vmatpush1.bf16.msra.mxu0 0
    %1831 = vmatprep.subr.bf16.mxu0 0
    %1832 = vmatpush1.bf16.msra.mxu0 0
    %1833 = vmatprep.mubr.bf16.mxu0 0
    %1834 = vmatmul.mubr.bf16.gmra.mrb[0].mxu0 %v1734
    %v1835 = vpop.f32.mrb[0].mxu0
    %v1836 = vadd.f32 %v1752, %v1835
    %v1837 = vpop.f32.mrb[0].mxu0
    %v1838 = vpop.f32.mrb[0].mxu0
    %v1839 = vadd.f32 %v1752, %v1838
    %v1840 = vpop.f32.mrb[0].mxu0
    %1841 = vdwg.mxu0
    %1842 = vst [vmem:[%s6] sm:$0xff] %v1836
    %1843 = vst [vmem:[%s6 + $0x8] sm:$0xff] %v1839
    // Predicated region
    $region42: #{keystroke_resnet.1} parent=1 // pred_check
      _
    $region43: #{keystroke_resnet.1} parent=1 // pred_check_branch
      %1845 = sbr.rel (0) target = $region45
    $region44: #{keystroke_resnet.1} parent=1 // pred_region
      _
    $region45: #{keystroke_resnet.1} parent=1 // pred_fallthru
      _
    // Predicated region
    $region46: #{keystroke_resnet.1} parent=1 // pred_check
      _
    $region47: #{keystroke_resnet.1} parent=1 // pred_check_branch
      %1847 = sbr.rel (0) target = $region49
    $region48: #{keystroke_resnet.1} parent=1 // pred_region
      _
    $region49: #{keystroke_resnet.1} parent=1 // pred_fallthru
      _
    %1848 = vsyncpa [#allocation3], 1
    %1849 = vsyncpa [#allocation5], 1
    %1850 = vsyncpa [#allocation8], 1

</llo_original>
